<compile_context>
chip_gen: v7x
topology: tpu7x:2x2x1
jax: 0.10.0
libtpu: 0.0.40
codegen_flags: <defaults>
</compile_context>

<pallas_src>
import functools

import jax
import jax.numpy as jnp
from jax import lax
from jax.experimental import pallas as pl
from jax.experimental.pallas import tpu as pltpu

D_IN = 41
H = 30
D_OUT = 1

_LANE = 128  # TPU lane width; also the padded feature width used for staging.


def _mlp_kernel(x_ref, w1t_ref, b1_ref, w2_ref, b2_ref, o_ref, stage_ref, *, chunk):
    """One grid step over a (block_n, d_in) slab of rows.

    x_ref    : (block_n, d_in)   natural row-major input slab
    w1t_ref  : (H, 128)          W1^T zero-padded on the feature axis
    b1_ref   : (H, 1)
    w2_ref   : (H, 1)
    b2_ref   : (1, 1)
    o_ref    : (1, block_n)      lane-dense output tile
    stage_ref: (chunk, 128)      VMEM staging buffer for the panel transpose
    """
    block_n, d_in = x_ref.shape
    num_chunks = block_n // chunk

    # Zero the staging buffer once per grid step so its padded feature lanes
    # [d_in, 128) are exactly 0.0 for every chunk (NaN-safe against the
    # zero-padded W1^T).  Done unconditionally: with megacore "parallel" a
    # core may never see program_id == 0, so a pl.when(pid == 0) init is unsafe.
    stage_ref[...] = jnp.zeros(stage_ref.shape, stage_ref.dtype)

    # Tiny weights: load once per grid step, reuse across chunks.
    w1t = w1t_ref[...]
    b1 = b1_ref[...]
    w2 = w2_ref[...]
    b2 = b2_ref[...]

    def body(c, carry):
        row = pl.multiple_of(c * chunk, chunk)
        # Stage the (chunk, d_in) slab into the lane-padded scratch, then do a
        # tile-aligned (chunk, 128) -> (128, chunk) transpose so the batch
        # dimension lands on lanes.
        stage_ref[:, :d_in] = x_ref[pl.ds(row, chunk), :]
        xt = stage_ref[...].T                                        # (128, chunk)
        # Layer 1 on the MXU, f32 accumulation; padded lanes contribute 0 * 0.
        h = jnp.dot(w1t, xt, preferred_element_type=jnp.float32)    # (H, chunk)
        h = jnp.maximum(h + b1, 0.0)                                 # bias + ReLU
        # Layer 2 (width 1): VPU multiply + XLU sublane reduce keeps the
        # result lane-dense; a width-1 MXU pass would be <1% utilized.
        y = jnp.sum(h * w2, axis=0, keepdims=True) + b2              # (1, chunk)
        o_ref[:, pl.ds(row, chunk)] = y.astype(o_ref.dtype)
        return carry

    # Partial unroll (factor must divide the trip count) so adjacent chunks'
    # staging / transpose / matmul / store overlap under the LLO scheduler.
    unroll = 4 if num_chunks % 4 == 0 else (2 if num_chunks % 2 == 0 else 1)
    lax.fori_loop(0, num_chunks, body, 0, unroll=unroll)


@functools.partial(jax.jit, static_argnames=("block_n", "chunk"))
def two_layer_net(x, w1, b1, w2, b2, *, block_n=32768, chunk=256):
    """Fused forward pass: relu(x @ w1 + b1) @ w2 + b2.

    x: (N, D_in); w1: (D_in, H); b1: (1, H); w2: (H, 1); b2: (1, 1).
    """
    n, d_in = x.shape
    h_dim = w1.shape[1]
    d_out = w2.shape[1]

    assert d_out == 1, "kernel fuses the width-1 output layer as a reduce"
    assert d_in <= _LANE, "features must fit in one lane tile"
    assert chunk % _LANE == 0 and block_n % chunk == 0

    # Clamp block_n for small inputs (production N=4.9M keeps the full tile).
    block_n = max(chunk, min(block_n, pl.cdiv(n, chunk) * chunk))

    # Tiny parameter massaging (a few KB): W1^T zero-padded on the feature
    # axis so the in-kernel K=128 contraction ignores the staging pad lanes.
    dt = x.dtype
    w1t_pad = jnp.zeros((h_dim, _LANE), dt).at[:, :d_in].set(w1.T.astype(dt))
    b1c = b1.reshape(h_dim, 1).astype(jnp.float32)
    w2c = w2.astype(jnp.float32)
    b2c = b2.reshape(d_out, 1).astype(jnp.float32)

    # VMEM budget: lane-padded, double-buffered x window + output window +
    # staging scratch, with headroom.  Stays under v7x's 64 MiB at the default
    # block_n; capped below v5e/v6e's 128 MiB for larger sweeps.
    itemsize = jnp.dtype(dt).itemsize
    vmem_bytes = (
        2 * block_n * _LANE * itemsize      # x window, 41 lanes padded to 128
        + 2 * 8 * block_n * itemsize        # (1, block_n) out window, sublane-padded
        + chunk * _LANE * itemsize          # staging scratch
    )
    vmem_limit = min(int(1.2 * vmem_bytes) + (2 << 20), 112 * 1024 * 1024)

    grid = (pl.cdiv(n, block_n),)  # ragged last block handled by Pallas masking
    yt = pl.pallas_call(
        functools.partial(_mlp_kernel, chunk=chunk),
        out_shape=jax.ShapeDtypeStruct((d_out, n), dt),
        grid_spec=pltpu.PrefetchScalarGridSpec(
            num_scalar_prefetch=0,
            grid=grid,
            in_specs=[
                # x streamed exactly once, in its natural (N, 41) layout.
                pl.BlockSpec((block_n, d_in), lambda i: (i, 0)),
                # Weights / biases: tiny, resident across the grid.
                pl.BlockSpec((h_dim, _LANE), lambda i: (0, 0)),
                pl.BlockSpec((h_dim, 1), lambda i: (0, 0)),
                pl.BlockSpec((h_dim, d_out), lambda i: (0, 0)),
                pl.BlockSpec((d_out, 1), lambda i: (0, 0)),
            ],
            # Lane-dense output tile: (1, block_n), never (block_n, 1).
            out_specs=pl.BlockSpec((d_out, block_n), lambda i: (0, i)),
            scratch_shapes=[pltpu.VMEM((chunk, _LANE), dt)],
        ),
        compiler_params=pltpu.CompilerParams(
            dimension_semantics=("parallel",),
            vmem_limit_bytes=vmem_limit,
        ),
    )(x, w1t_pad, b1c, w2c, b2c)

    # (1, N) -> (N, 1) is a pure reshape of contiguous data (no transpose copy).
    return yt.reshape(n, d_out)


def init_params(key, d_in=D_IN, h=H, d_out=D_OUT):
    """Deterministic init mimicking torch.nn.Linear (uniform +/- 1/sqrt(fan_in))."""
    k1, k2, k3, k4 = jax.random.split(key, 4)
    lim1 = 1.0 / jnp.sqrt(d_in)
    lim2 = 1.0 / jnp.sqrt(h)
    w1 = jax.random.uniform(k1, (d_in, h), jnp.float32, -lim1, lim1)
    b1 = jax.random.uniform(k2, (1, h), jnp.float32, -lim1, lim1)
    w2 = jax.random.uniform(k3, (h, d_out), jnp.float32, -lim2, lim2)
    b2 = jax.random.uniform(k4, (1, d_out), jnp.float32, -lim2, lim2)
    return w1, b1, w2, b2


if __name__ == "__main__":
    key = jax.random.PRNGKey(0)
    kx, kp = jax.random.split(key)

    # Small synthetic batch; N deliberately NOT a multiple of chunk/block_n so
    # the ragged-last-block (masked writeback) path is exercised.  The real
    # workload is N=4,898,431 with the default block_n=32768.
    N = 3000
    x = jax.random.normal(kx, (N, D_IN), jnp.float32)
    w1, b1, w2, b2 = init_params(kp)

    y_ref = jnp.maximum(x @ w1 + b1, 0.0) @ w2 + b2

    # Config 1: small blocks -> multi-block grid, multi-chunk inner loop, ragged tail.
    y_small = jax.block_until_ready(
        two_layer_net(x, w1, b1, w2, b2, block_n=1024, chunk=256))
    # Config 2: default (production) configuration (block_n clamps to 3072 here).
    y_default = jax.block_until_ready(two_layer_net(x, w1, b1, w2, b2))

    assert y_small.shape == (N, D_OUT) and y_default.shape == (N, D_OUT)
    assert jnp.allclose(y_small, y_ref, atol=1e-4, rtol=1e-4), "mismatch (small blocks)"
    assert jnp.allclose(y_default, y_ref, atol=1e-4, rtol=1e-4), "mismatch (default blocks)"

    print("KERNEL_OK")
</pallas_src>

<mosaic_0001>
module attributes {stable_mosaic.version = 11 : i64} {
  func.func @_mlp_kernel(%arg0: i32, %arg1: memref<1024x41xf32, #tpu.memory_space<vmem>>, %arg2: memref<30x128xf32, #tpu.memory_space<vmem>>, %arg3: memref<30x1xf32, #tpu.memory_space<vmem>>, %arg4: memref<30x1xf32, #tpu.memory_space<vmem>>, %arg5: memref<1x1xf32, #tpu.memory_space<vmem>>, %arg6: memref<1x1024xf32, #tpu.memory_space<vmem>>, %arg7: memref<256x128xf32, #tpu.memory_space<vmem>>) attributes {dimension_semantics = [#tpu.dimension_semantics<parallel>], iteration_bounds = array<i64: 3>, scalar_prefetch = 0 : i64, scratch_operands = 1 : i64, tpu.core_type = #tpu.core_type<tc>, window_params = [{transform_indices = @transform_0, window_bounds = array<i64: 1024, 41>}, {pipeline_mode = #tpu.pipeline_mode<synchronous>, transform_indices = @transform_1, window_bounds = array<i64: 30, 128>}, {pipeline_mode = #tpu.pipeline_mode<synchronous>, transform_indices = @transform_2, window_bounds = array<i64: 30, 1>}, {pipeline_mode = #tpu.pipeline_mode<synchronous>, transform_indices = @transform_3, window_bounds = array<i64: 30, 1>}, {pipeline_mode = #tpu.pipeline_mode<synchronous>, transform_indices = @transform_4, window_bounds = array<i64: 1, 1>}, {transform_indices = @transform_5, window_bounds = array<i64: 1, 1024>}]} {
    %cst = arith.constant 0.000000e+00 : f32
    %0 = vector.broadcast %cst : f32 to vector<256x128xf32>
    %c0 = arith.constant 0 : index
    %c0_0 = arith.constant 0 : index
    %1 = vector.load %arg7[%c0, %c0_0] : memref<256x128xf32, #tpu.memory_space<vmem>>, vector<256x128xf32>
    tpu.vector_store %arg7[%c0, %c0_0], %0 {strides = array<i32>} : memref<256x128xf32, #tpu.memory_space<vmem>>, vector<256x128xf32>,
    %c0_1 = arith.constant 0 : index
    %c0_2 = arith.constant 0 : index
    %2 = vector.load %arg2[%c0_1, %c0_2] : memref<30x128xf32, #tpu.memory_space<vmem>>, vector<30x128xf32>
    %c0_3 = arith.constant 0 : index
    %c0_4 = arith.constant 0 : index
    %3 = vector.load %arg3[%c0_3, %c0_4] : memref<30x1xf32, #tpu.memory_space<vmem>>, vector<30x1xf32>
    %c0_5 = arith.constant 0 : index
    %c0_6 = arith.constant 0 : index
    %4 = vector.load %arg4[%c0_5, %c0_6] : memref<30x1xf32, #tpu.memory_space<vmem>>, vector<30x1xf32>
    %c0_7 = arith.constant 0 : index
    %c0_8 = arith.constant 0 : index
    %5 = vector.load %arg5[%c0_7, %c0_8] : memref<1x1xf32, #tpu.memory_space<vmem>>, vector<1x1xf32>
    %c0_i32 = arith.constant 0 : i32
    %c256_i32 = arith.constant 256 : i32
    %6 = arith.muli %c0_i32, %c256_i32 : i32
    %7 = tpu.assume_multiple %6, 256 : i32
    %8 = arith.index_cast %7 : i32 to index
    %c0_9 = arith.constant 0 : index
    %9 = vector.load %arg1[%8, %c0_9] : memref<1024x41xf32, #tpu.memory_space<vmem>>, vector<256x41xf32>
    %c0_10 = arith.constant 0 : index
    %c0_11 = arith.constant 0 : index
    %10 = vector.load %arg7[%c0_10, %c0_11] : memref<256x128xf32, #tpu.memory_space<vmem>>, vector<256x41xf32>
    tpu.vector_store %arg7[%c0_10, %c0_11], %9 {strides = array<i32>} : memref<256x128xf32, #tpu.memory_space<vmem>>, vector<256x41xf32>,
    %c0_12 = arith.constant 0 : index
    %c0_13 = arith.constant 0 : index
    %11 = vector.load %arg7[%c0_12, %c0_13] : memref<256x128xf32, #tpu.memory_space<vmem>>, vector<256x128xf32>
    %12 = tpu.transpose %11, [1, 0] : vector<256x128xf32> -> vector<128x256xf32>
    %cst_14 = arith.constant dense<0.000000e+00> : vector<30x256xf32>
    %13 = tpu.matmul %2, %12, %cst_14 {dimension_numbers = #tpu.dot_dimension_numbers<[1], [0], [0], [1], [0, 0, 1, 1], [], []>} : vector<30x128xf32>, vector<128x256xf32>, vector<30x256xf32> -> vector<30x256xf32>
    %14 = vector.broadcast %3 : vector<30x1xf32> to vector<30x256xf32>
    %15 = arith.addf %13, %14 : vector<30x256xf32>
    %cst_15 = arith.constant 0.000000e+00 : f32
    %16 = vector.broadcast %cst_15 : f32 to vector<30x256xf32>
    %17 = arith.maximumf %15, %16 : vector<30x256xf32>
    %18 = vector.broadcast %4 : vector<30x1xf32> to vector<30x256xf32>
    %19 = arith.mulf %17, %18 : vector<30x256xf32>
    %cst_16 = arith.constant dense<0.000000e+00> : vector<256xf32>
    %20 = vector.multi_reduction <add>, %19, %cst_16 [0] : vector<30x256xf32> to vector<256xf32>
    %21 = vector.shape_cast %20 : vector<256xf32> to vector<1x256xf32>
    %22 = vector.broadcast %5 : vector<1x1xf32> to vector<1x256xf32>
    %23 = arith.addf %21, %22 : vector<1x256xf32>
    %c0_17 = arith.constant 0 : index
    %24 = arith.index_cast %7 : i32 to index
    %25 = vector.load %arg6[%c0_17, %24] : memref<1x1024xf32, #tpu.memory_space<vmem>>, vector<1x256xf32>
    tpu.vector_store %arg6[%c0_17, %24], %23 {strides = array<i32>} : memref<1x1024xf32, #tpu.memory_space<vmem>>, vector<1x256xf32>,
    %c1_i32 = arith.constant 1 : i32
    %c256_i32_18 = arith.constant 256 : i32
    %26 = arith.muli %c1_i32, %c256_i32_18 : i32
    %27 = tpu.assume_multiple %26, 256 : i32
    %28 = arith.index_cast %27 : i32 to index
    %c0_19 = arith.constant 0 : index
    %29 = vector.load %arg1[%28, %c0_19] : memref<1024x41xf32, #tpu.memory_space<vmem>>, vector<256x41xf32>
    %c0_20 = arith.constant 0 : index
    %c0_21 = arith.constant 0 : index
    %30 = vector.load %arg7[%c0_20, %c0_21] : memref<256x128xf32, #tpu.memory_space<vmem>>, vector<256x41xf32>
    tpu.vector_store %arg7[%c0_20, %c0_21], %29 {strides = array<i32>} : memref<256x128xf32, #tpu.memory_space<vmem>>, vector<256x41xf32>,
    %c0_22 = arith.constant 0 : index
    %c0_23 = arith.constant 0 : index
    %31 = vector.load %arg7[%c0_22, %c0_23] : memref<256x128xf32, #tpu.memory_space<vmem>>, vector<256x128xf32>
    %32 = tpu.transpose %31, [1, 0] : vector<256x128xf32> -> vector<128x256xf32>
    %cst_24 = arith.constant dense<0.000000e+00> : vector<30x256xf32>
    %33 = tpu.matmul %2, %32, %cst_24 {dimension_numbers = #tpu.dot_dimension_numbers<[1], [0], [0], [1], [0, 0, 1, 1], [], []>} : vector<30x128xf32>, vector<128x256xf32>, vector<30x256xf32> -> vector<30x256xf32>
    %34 = vector.broadcast %3 : vector<30x1xf32> to vector<30x256xf32>
    %35 = arith.addf %33, %34 : vector<30x256xf32>
    %cst_25 = arith.constant 0.000000e+00 : f32
    %36 = vector.broadcast %cst_25 : f32 to vector<30x256xf32>
    %37 = arith.maximumf %35, %36 : vector<30x256xf32>
    %38 = vector.broadcast %4 : vector<30x1xf32> to vector<30x256xf32>
    %39 = arith.mulf %37, %38 : vector<30x256xf32>
    %cst_26 = arith.constant dense<0.000000e+00> : vector<256xf32>
    %40 = vector.multi_reduction <add>, %39, %cst_26 [0] : vector<30x256xf32> to vector<256xf32>
    %41 = vector.shape_cast %40 : vector<256xf32> to vector<1x256xf32>
    %42 = vector.broadcast %5 : vector<1x1xf32> to vector<1x256xf32>
    %43 = arith.addf %41, %42 : vector<1x256xf32>
    %c0_27 = arith.constant 0 : index
    %44 = arith.index_cast %27 : i32 to index
    %45 = vector.load %arg6[%c0_27, %44] : memref<1x1024xf32, #tpu.memory_space<vmem>>, vector<1x256xf32>
    tpu.vector_store %arg6[%c0_27, %44], %43 {strides = array<i32>} : memref<1x1024xf32, #tpu.memory_space<vmem>>, vector<1x256xf32>,
    %c2_i32 = arith.constant 2 : i32
    %c256_i32_28 = arith.constant 256 : i32
    %46 = arith.muli %c2_i32, %c256_i32_28 : i32
    %47 = tpu.assume_multiple %46, 256 : i32
    %48 = arith.index_cast %47 : i32 to index
    %c0_29 = arith.constant 0 : index
    %49 = vector.load %arg1[%48, %c0_29] : memref<1024x41xf32, #tpu.memory_space<vmem>>, vector<256x41xf32>
    %c0_30 = arith.constant 0 : index
    %c0_31 = arith.constant 0 : index
    %50 = vector.load %arg7[%c0_30, %c0_31] : memref<256x128xf32, #tpu.memory_space<vmem>>, vector<256x41xf32>
    tpu.vector_store %arg7[%c0_30, %c0_31], %49 {strides = array<i32>} : memref<256x128xf32, #tpu.memory_space<vmem>>, vector<256x41xf32>,
    %c0_32 = arith.constant 0 : index
    %c0_33 = arith.constant 0 : index
    %51 = vector.load %arg7[%c0_32, %c0_33] : memref<256x128xf32, #tpu.memory_space<vmem>>, vector<256x128xf32>
    %52 = tpu.transpose %51, [1, 0] : vector<256x128xf32> -> vector<128x256xf32>
    %cst_34 = arith.constant dense<0.000000e+00> : vector<30x256xf32>
    %53 = tpu.matmul %2, %52, %cst_34 {dimension_numbers = #tpu.dot_dimension_numbers<[1], [0], [0], [1], [0, 0, 1, 1], [], []>} : vector<30x128xf32>, vector<128x256xf32>, vector<30x256xf32> -> vector<30x256xf32>
    %54 = vector.broadcast %3 : vector<30x1xf32> to vector<30x256xf32>
    %55 = arith.addf %53, %54 : vector<30x256xf32>
    %cst_35 = arith.constant 0.000000e+00 : f32
    %56 = vector.broadcast %cst_35 : f32 to vector<30x256xf32>
    %57 = arith.maximumf %55, %56 : vector<30x256xf32>
    %58 = vector.broadcast %4 : vector<30x1xf32> to vector<30x256xf32>
    %59 = arith.mulf %57, %58 : vector<30x256xf32>
    %cst_36 = arith.constant dense<0.000000e+00> : vector<256xf32>
    %60 = vector.multi_reduction <add>, %59, %cst_36 [0] : vector<30x256xf32> to vector<256xf32>
    %61 = vector.shape_cast %60 : vector<256xf32> to vector<1x256xf32>
    %62 = vector.broadcast %5 : vector<1x1xf32> to vector<1x256xf32>
    %63 = arith.addf %61, %62 : vector<1x256xf32>
    %c0_37 = arith.constant 0 : index
    %64 = arith.index_cast %47 : i32 to index
    %65 = vector.load %arg6[%c0_37, %64] : memref<1x1024xf32, #tpu.memory_space<vmem>>, vector<1x256xf32>
    tpu.vector_store %arg6[%c0_37, %64], %63 {strides = array<i32>} : memref<1x1024xf32, #tpu.memory_space<vmem>>, vector<1x256xf32>,
    %c3_i32 = arith.constant 3 : i32
    %c256_i32_38 = arith.constant 256 : i32
    %66 = arith.muli %c3_i32, %c256_i32_38 : i32
    %67 = tpu.assume_multiple %66, 256 : i32
    %68 = arith.index_cast %67 : i32 to index
    %c0_39 = arith.constant 0 : index
    %69 = vector.load %arg1[%68, %c0_39] : memref<1024x41xf32, #tpu.memory_space<vmem>>, vector<256x41xf32>
    %c0_40 = arith.constant 0 : index
    %c0_41 = arith.constant 0 : index
    %70 = vector.load %arg7[%c0_40, %c0_41] : memref<256x128xf32, #tpu.memory_space<vmem>>, vector<256x41xf32>
    tpu.vector_store %arg7[%c0_40, %c0_41], %69 {strides = array<i32>} : memref<256x128xf32, #tpu.memory_space<vmem>>, vector<256x41xf32>,
    %c0_42 = arith.constant 0 : index
    %c0_43 = arith.constant 0 : index
    %71 = vector.load %arg7[%c0_42, %c0_43] : memref<256x128xf32, #tpu.memory_space<vmem>>, vector<256x128xf32>
    %72 = tpu.transpose %71, [1, 0] : vector<256x128xf32> -> vector<128x256xf32>
    %cst_44 = arith.constant dense<0.000000e+00> : vector<30x256xf32>
    %73 = tpu.matmul %2, %72, %cst_44 {dimension_numbers = #tpu.dot_dimension_numbers<[1], [0], [0], [1], [0, 0, 1, 1], [], []>} : vector<30x128xf32>, vector<128x256xf32>, vector<30x256xf32> -> vector<30x256xf32>
    %74 = vector.broadcast %3 : vector<30x1xf32> to vector<30x256xf32>
    %75 = arith.addf %73, %74 : vector<30x256xf32>
    %cst_45 = arith.constant 0.000000e+00 : f32
    %76 = vector.broadcast %cst_45 : f32 to vector<30x256xf32>
    %77 = arith.maximumf %75, %76 : vector<30x256xf32>
    %78 = vector.broadcast %4 : vector<30x1xf32> to vector<30x256xf32>
    %79 = arith.mulf %77, %78 : vector<30x256xf32>
    %cst_46 = arith.constant dense<0.000000e+00> : vector<256xf32>
    %80 = vector.multi_reduction <add>, %79, %cst_46 [0] : vector<30x256xf32> to vector<256xf32>
    %81 = vector.shape_cast %80 : vector<256xf32> to vector<1x256xf32>
    %82 = vector.broadcast %5 : vector<1x1xf32> to vector<1x256xf32>
    %83 = arith.addf %81, %82 : vector<1x256xf32>
    %c0_47 = arith.constant 0 : index
    %84 = arith.index_cast %67 : i32 to index
    %85 = vector.load %arg6[%c0_47, %84] : memref<1x1024xf32, #tpu.memory_space<vmem>>, vector<1x256xf32>
    tpu.vector_store %arg6[%c0_47, %84], %83 {strides = array<i32>} : memref<1x1024xf32, #tpu.memory_space<vmem>>, vector<1x256xf32>,
    %c4_i32 = arith.constant 4 : i32
    return
  }
  func.func @transform_0(%arg0: i32) -> (i32, i32) {
    %c0_i32 = arith.constant 0 : i32
    %c0_i32_0 = arith.constant 0 : i32
    return %arg0, %c0_i32 : i32, i32
  }
  func.func @transform_1(%arg0: i32) -> (i32, i32) {
    %c0_i32 = arith.constant 0 : i32
    %c0_i32_0 = arith.constant 0 : i32
    %c0_i32_1 = arith.constant 0 : i32
    return %c0_i32, %c0_i32_0 : i32, i32
  }
  func.func @transform_2(%arg0: i32) -> (i32, i32) {
    %c0_i32 = arith.constant 0 : i32
    %c0_i32_0 = arith.constant 0 : i32
    %c0_i32_1 = arith.constant 0 : i32
    return %c0_i32, %c0_i32_0 : i32, i32
  }
  func.func @transform_3(%arg0: i32) -> (i32, i32) {
    %c0_i32 = arith.constant 0 : i32
    %c0_i32_0 = arith.constant 0 : i32
    %c0_i32_1 = arith.constant 0 : i32
    return %c0_i32, %c0_i32_0 : i32, i32
  }
  func.func @transform_4(%arg0: i32) -> (i32, i32) {
    %c0_i32 = arith.constant 0 : i32
    %c0_i32_0 = arith.constant 0 : i32
    %c0_i32_1 = arith.constant 0 : i32
    return %c0_i32, %c0_i32_0 : i32, i32
  }
  func.func @transform_5(%arg0: i32) -> (i32, i32) {
    %c0_i32 = arith.constant 0 : i32
    %c0_i32_0 = arith.constant 0 : i32
    return %c0_i32, %arg0 : i32, i32
  }
}

</mosaic_0001>

<llo_original>
// kernel: two_layer_net.1
$region0: #{two_layer_net.1}
  #allocation0 [shape = 'u32[]', space=smem, size = 0x4, offset = 0x4, fixed_abs, tag = 'smem constant byte address 0x4 - core index']
  #allocation1 [shape = 'u32[144,128]{1,0:T(1,128)}', space=vmem, size = 0x12000, scoped, tag = 'internal scratch']
  #allocation2 [shape = 'f32[256,128]{1,0:T(8,128)}', space=vmem, size = 0x20000, scoped, tag = 'scratch operand']
  #allocation3 [shape = 'f32[1,1]{1,0:T(1,128)S(1)}', space=vmem, size = 0x200, scoped, tag = 'scoped memory for two_layer_net.1']
  %s0 = inlined_call_operand.vmem [shape: f32[3000,41], index: 0, kind: input, shape index: {}]
  %s1 = inlined_call_operand.vmem [shape: f32[30,128], index: 1, kind: input, shape index: {}]
  %s2 = inlined_call_operand.vmem [shape: f32[30,1], index: 2, kind: input, shape index: {}]
  %s3 = inlined_call_operand.vmem [shape: f32[30,1], index: 3, kind: input, shape index: {}]
  %s4 = inlined_call_operand.<no memory space> [shape: f32[1,1], index: 4, kind: input, shape index: {}]
  %s5 = inlined_call_operand.hbm [shape: f32[1,3000], index: 5, kind: output, shape index: {}]
  %s6 = sld [smem:[#allocation0]]
  $region53: #{two_layer_net.1} parent=0
    _
  %s8 = ssub.s32 1, %s6
  %s9 = scalar_select 0, %s8, %s6
  %v10 = vstv %s4
  %11 = vst [vmem:[#allocation3] sm:$0x1] %v10
  $region1: #{two_layer_net.1} parent=0
    #allocation4 [shape = 'u8[8192]{0}', space=vmem, size = 0x2000, scoped, tag = 'output window, operand 0']
    #allocation5 [shape = 's32[2]{0}', space=sflag, size = 0x8, scoped, tag = 'scoped memory for two_layer_net.1']
    %12 = vsyncpa [#allocation5], 0
    %s13 = scalar_lea.sflag [#allocation5], 1
    %14 = vsyncpa %s13, 0
    loop: start=0, step=1, limit=5
    $region2: #{two_layer_net.1} parent=1 // loop_pre_header
      _
    $region3: #{two_layer_net.1} parent=1 // loop_header
      %s16 = sphi 0, %s20
      %p17 = scmp.ge.s32.totalorder %s16, 5
      %s26 = sphi 0, %s28
      %s29 = sphi 0, %s26
      %s30 = sphi 0, %s29
      %s46 = sphi 0, %s30
      %s50 = sphi 0, %s50
      %s52 = sphi 0, %s50
      %s53 = sphi 0, %s52
      %s67 = sphi 0, %s53
      %s71 = sphi 0, %s71
      %s73 = sphi 0, %s71
      %s74 = sphi 0, %s73
      %s88 = sphi 0, %s74
      %s92 = sphi 0, %s92
      %s94 = sphi 0, %s92
      %s95 = sphi 0, %s94
      %s109 = sphi 0, %s95
      %s113 = sphi 0, %s113
      %s115 = sphi 0, %s113
      %s116 = sphi 0, %s115
      %s130 = sphi 0, %s116
      %s136 = sphi 0, %s138
      %s139 = sphi 0, %s136
      %s140 = sphi 0, %s139
      %s156 = sphi 0, %s140
    $region4: #{two_layer_net.1} parent=1 // loop_header_branch
      %19 = sbr.rel (%p17) target = $region8
    $region5: #{two_layer_net.1} parent=1 // loop_body
      %s21 = ssub.s32 %s16, 1
      %s22 = ssub.s32 %s16, 2
      %s23 = sadd.s32 %s16, 1
      %s24 = ssub.s32 %s16, %s23
      %p25 = scmp.eq.s32.totalorder %s24, 0
      %s27 = sadd.s32 %s26, 1
      %s28 = scalar_select %p25, %s26, %s27
      %p31 = pneg %p25
      %p32 = scmp.eq.s32.totalorder %s16, 2
      %p33 = por %p31, %p32
      %p34 = scmp.ne.s32.totalorder %s26, %s29
      %p35 = scmp.eq.s32.totalorder %s16, 0
      %p36 = por %p34, %p35
      %p37 = scmp.ne.s32.totalorder %s26, %s29
      %p38 = scmp.eq.s32.totalorder %s21, 2
      %p39 = por %p37, %p38
      %p40 = scmp.ne.s32.totalorder %s29, %s30
      %p41 = scmp.eq.s32.totalorder %s21, 0
      %p42 = por %p40, %p41
      %p43 = scmp.ne.s32.totalorder %s29, %s30
      %p44 = scmp.eq.s32.totalorder %s22, 2
      %p45 = por %p43, %p44
      %p47 = scmp.ne.s32.totalorder %s30, %s46
      %p48 = scmp.eq.s32.totalorder %s22, 0
      %p49 = por %p47, %p48
      %s51 = sadd.s32 %s50, 1
      %p54 = scmp.eq.s32.totalorder %s16, 2
      %p55 = scmp.ne.s32.totalorder %s50, %s52
      %p56 = scmp.eq.s32.totalorder %s16, 0
      %p57 = por %p55, %p56
      %p58 = scmp.ne.s32.totalorder %s50, %s52
      %p59 = scmp.eq.s32.totalorder %s21, 2
      %p60 = por %p58, %p59
      %p61 = scmp.ne.s32.totalorder %s52, %s53
      %p62 = scmp.eq.s32.totalorder %s21, 0
      %p63 = por %p61, %p62
      %p64 = scmp.ne.s32.totalorder %s52, %s53
      %p65 = scmp.eq.s32.totalorder %s22, 2
      %p66 = por %p64, %p65
      %p68 = scmp.ne.s32.totalorder %s53, %s67
      %p69 = scmp.eq.s32.totalorder %s22, 0
      %p70 = por %p68, %p69
      %s72 = sadd.s32 %s71, 1
      %p75 = scmp.eq.s32.totalorder %s16, 2
      %p76 = scmp.ne.s32.totalorder %s71, %s73
      %p77 = scmp.eq.s32.totalorder %s16, 0
      %p78 = por %p76, %p77
      %p79 = scmp.ne.s32.totalorder %s71, %s73
      %p80 = scmp.eq.s32.totalorder %s21, 2
      %p81 = por %p79, %p80
      %p82 = scmp.ne.s32.totalorder %s73, %s74
      %p83 = scmp.eq.s32.totalorder %s21, 0
      %p84 = por %p82, %p83
      %p85 = scmp.ne.s32.totalorder %s73, %s74
      %p86 = scmp.eq.s32.totalorder %s22, 2
      %p87 = por %p85, %p86
      %p89 = scmp.ne.s32.totalorder %s74, %s88
      %p90 = scmp.eq.s32.totalorder %s22, 0
      %p91 = por %p89, %p90
      %s93 = sadd.s32 %s92, 1
      %p96 = scmp.eq.s32.totalorder %s16, 2
      %p97 = scmp.ne.s32.totalorder %s92, %s94
      %p98 = scmp.eq.s32.totalorder %s16, 0
      %p99 = por %p97, %p98
      %p100 = scmp.ne.s32.totalorder %s92, %s94
      %p101 = scmp.eq.s32.totalorder %s21, 2
      %p102 = por %p100, %p101
      %p103 = scmp.ne.s32.totalorder %s94, %s95
      %p104 = scmp.eq.s32.totalorder %s21, 0
      %p105 = por %p103, %p104
      %p106 = scmp.ne.s32.totalorder %s94, %s95
      %p107 = scmp.eq.s32.totalorder %s22, 2
      %p108 = por %p106, %p107
      %p110 = scmp.ne.s32.totalorder %s95, %s109
      %p111 = scmp.eq.s32.totalorder %s22, 0
      %p112 = por %p110, %p111
      %s114 = sadd.s32 %s113, 1
      %p117 = scmp.eq.s32.totalorder %s16, 2
      %p118 = scmp.ne.s32.totalorder %s113, %s115
      %p119 = scmp.eq.s32.totalorder %s16, 0
      %p120 = por %p118, %p119
      %p121 = scmp.ne.s32.totalorder %s113, %s115
      %p122 = scmp.eq.s32.totalorder %s21, 2
      %p123 = por %p121, %p122
      %p124 = scmp.ne.s32.totalorder %s115, %s116
      %p125 = scmp.eq.s32.totalorder %s21, 0
      %p126 = por %p124, %p125
      %p127 = scmp.ne.s32.totalorder %s115, %s116
      %p128 = scmp.eq.s32.totalorder %s22, 2
      %p129 = por %p127, %p128
      %p131 = scmp.ne.s32.totalorder %s116, %s130
      %p132 = scmp.eq.s32.totalorder %s22, 0
      %p133 = por %p131, %p132
      %s134 = ssub.s32 %s16, %s23
      %p135 = scmp.eq.s32.totalorder %s134, 0
      %s137 = sadd.s32 %s136, 1
      %s138 = scalar_select %p135, %s136, %s137
      %p141 = pneg %p135
      %p142 = scmp.eq.s32.totalorder %s16, 2
      %p143 = por %p141, %p142
      %p144 = scmp.ne.s32.totalorder %s136, %s139
      %p145 = scmp.eq.s32.totalorder %s16, 0
      %p146 = por %p144, %p145
      %p147 = scmp.ne.s32.totalorder %s136, %s139
      %p148 = scmp.eq.s32.totalorder %s21, 2
      %p149 = por %p147, %p148
      %p150 = scmp.ne.s32.totalorder %s139, %s140
      %p151 = scmp.eq.s32.totalorder %s21, 0
      %p152 = por %p150, %p151
      %p153 = scmp.ne.s32.totalorder %s139, %s140
      %p154 = scmp.eq.s32.totalorder %s22, 2
      %p155 = por %p153, %p154
      %p157 = scmp.ne.s32.totalorder %s140, %s156
      %p158 = scmp.eq.s32.totalorder %s22, 0
      %p159 = por %p157, %p158
      %p160 = scmp.le.s32.totalorder 1, %s16
      %p161 = scmp.lt.s32.totalorder %s16, 4
      %p162 = pnand %p160, %p161
      %p163 = pneg %p162
      // Predicated region
      $region9: #{two_layer_net.1} parent=5 // pred_check
        _
      $region10: #{two_layer_net.1} parent=5 // pred_check_branch
        %165 = sbr.rel (%p162) target = $region12
      $region11: #{two_layer_net.1} parent=5 // pred_region
        %s166 = ssub.s32 %s16, 1
        // Predicated region
        $region13: #{two_layer_net.1} parent=11 // pred_check
          %p167 = pneg %p63
        $region14: #{two_layer_net.1} parent=11 // pred_check_branch
          %169 = sbr.rel (%p167) target = $region16
        $region15: #{two_layer_net.1} parent=11 // pred_region
          _
        $region16: #{two_layer_net.1} parent=11 // pred_fallthru
          _
        // Predicated region
        $region17: #{two_layer_net.1} parent=11 // pred_check
          %p170 = pneg %p84
        $region18: #{two_layer_net.1} parent=11 // pred_check_branch
          %172 = sbr.rel (%p170) target = $region20
        $region19: #{two_layer_net.1} parent=11 // pred_region
          _
        $region20: #{two_layer_net.1} parent=11 // pred_fallthru
          _
        // Predicated region
        $region21: #{two_layer_net.1} parent=11 // pred_check
          %p173 = pneg %p105
        $region22: #{two_layer_net.1} parent=11 // pred_check_branch
          %175 = sbr.rel (%p173) target = $region24
        $region23: #{two_layer_net.1} parent=11 // pred_region
          _
        $region24: #{two_layer_net.1} parent=11 // pred_fallthru
          _
        // Predicated region
        $region25: #{two_layer_net.1} parent=11 // pred_check
          %p176 = pneg %p126
        $region26: #{two_layer_net.1} parent=11 // pred_check_branch
          %178 = sbr.rel (%p176) target = $region28
        $region27: #{two_layer_net.1} parent=11 // pred_region
          _
        $region28: #{two_layer_net.1} parent=11 // pred_fallthru
          _
      $region12: #{two_layer_net.1} parent=5 // pred_fallthru
        _
      %p179 = scmp.lt.s32.totalorder %s16, 3
      // Predicated region
      $region29: #{two_layer_net.1} parent=5 // pred_check
        %p180 = pneg %p179
      $region30: #{two_layer_net.1} parent=5 // pred_check_branch
        %182 = sbr.rel (%p180) target = $region32
      $region31: #{two_layer_net.1} parent=5 // pred_region
        // Predicated region
        $region33: #{two_layer_net.1} parent=31 // pred_check
          %p183 = pneg %p36
        $region34: #{two_layer_net.1} parent=31 // pred_check_branch
          %185 = sbr.rel (%p183) target = $region36
        $region35: #{two_layer_net.1} parent=31 // pred_region
          %s186 = smul.u32 128, %s16
          %s187 = ssub.s32 375, %s186
          %p188 = scmp.lt.s32.totalorder %s187, 128
          %s189 = scalar_select %p188, %s187, 128
          %s190 = smul.u32 128, %s189
          %p191 = scmp.lt.s32.totalorder %s186, 374
          %s192 = scalar_select %p191, %s186, 374
          %s193 = smul.addr %s192, 8
          %s194 = scalar_lea.vmem %s0, %s193
          %s195 = smul.u32 128, %s16
          %s196 = ssub.s32 375, %s195
          %p197 = scmp.lt.s32.totalorder %s196, 128
          %s198 = scalar_select %p197, %s196, 128
          %s199 = smul.u32 128, %s198
        $region36: #{two_layer_net.1} parent=31 // pred_fallthru
          _
      $region32: #{two_layer_net.1} parent=5 // pred_fallthru
        _
      %p200 = scmp.le.s32.totalorder 1, %s16
      %p201 = scmp.lt.s32.totalorder %s16, 4
      %p202 = pnand %p200, %p201
      %p203 = pneg %p202
      // Predicated region
      $region37: #{two_layer_net.1} parent=5 // pred_check
        _
      $region38: #{two_layer_net.1} parent=5 // pred_check_branch
        %205 = sbr.rel (%p202) target = $region40
      $region39: #{two_layer_net.1} parent=5 // pred_region
        %s206 = ssub.s32 %s16, 1
        %s207 = smul.u32 128, %s21
        %s208 = ssub.s32 375, %s207
        %p209 = scmp.lt.s32.totalorder %s208, 128
        %s210 = scalar_select %p209, %s208, 128
        %s211 = smul.u32 128, %s210
        %p212 = scmp.lt.s32.totalorder %s207, 374
        %s213 = scalar_select %p212, %s207, 374
        %s214 = smul.addr %s213, 8
        %s215 = scalar_lea.vmem %s0, %s214
        %p216 = pneg %p42
        %p217 = pneg %p39
        %p218 = pneg %p63
        %p219 = pneg %p60
        %p220 = pneg %p84
        %p221 = pneg %p81
        %p222 = pneg %p105
        %p223 = pneg %p102
        %p224 = pneg %p126
        %p225 = pneg %p123
        %p226 = pneg %p152
        %p227 = pneg %p149
        %s228 = sand.u32 %s139, 1
        %s229 = scalar_lea.sflag [#allocation5], %s228
        %s230 = sand.u32 %s139, 1
        %s231 = smul.addr %s230, 8
        %s232 = scalar_lea.vmem [#allocation4], %s231
        %s233 = smul.u32 128, %s21
        %s234 = ssub.s32 375, %s233
        %p235 = scmp.lt.s32.totalorder %s234, 128
        %s236 = scalar_select %p235, %s234, 128
        %s237 = smul.u32 128, %s236
        %p238 = scmp.lt.s32.totalorder %s233, 374
        %s239 = scalar_select %p238, %s233, 374
        %s240 = smul.addr %s239, 8
        %s241 = scalar_lea.vmem %s0, %s240
        %s242 = smul.u32 128, %s21
        %s243 = ssub.s32 375, %s242
        %p244 = scmp.lt.s32.totalorder %s243, 128
        %s245 = scalar_select %p244, %s243, 128
        %s246 = smul.u32 128, %s245
        %s247 = smul.u32 8, %s21
        %248 = vst [vmem:[#allocation2] sm:$0xff] 0.0
        %249 = vst [vmem:[#allocation2 + $0x8] sm:$0xff] 0.0
        %250 = vst [vmem:[#allocation2 + $0x10] sm:$0xff] 0.0
        %251 = vst [vmem:[#allocation2 + $0x18] sm:$0xff] 0.0
        %252 = vst [vmem:[#allocation2 + $0x20] sm:$0xff] 0.0
        %253 = vst [vmem:[#allocation2 + $0x28] sm:$0xff] 0.0
        %254 = vst [vmem:[#allocation2 + $0x30] sm:$0xff] 0.0
        %255 = vst [vmem:[#allocation2 + $0x38] sm:$0xff] 0.0
        %256 = vst [vmem:[#allocation2 + $0x40] sm:$0xff] 0.0
        %257 = vst [vmem:[#allocation2 + $0x48] sm:$0xff] 0.0
        %258 = vst [vmem:[#allocation2 + $0x50] sm:$0xff] 0.0
        %259 = vst [vmem:[#allocation2 + $0x58] sm:$0xff] 0.0
        %260 = vst [vmem:[#allocation2 + $0x60] sm:$0xff] 0.0
        %261 = vst [vmem:[#allocation2 + $0x68] sm:$0xff] 0.0
        %262 = vst [vmem:[#allocation2 + $0x70] sm:$0xff] 0.0
        %263 = vst [vmem:[#allocation2 + $0x78] sm:$0xff] 0.0
        %264 = vst [vmem:[#allocation2 + $0x80] sm:$0xff] 0.0
        %265 = vst [vmem:[#allocation2 + $0x88] sm:$0xff] 0.0
        %266 = vst [vmem:[#allocation2 + $0x90] sm:$0xff] 0.0
        %267 = vst [vmem:[#allocation2 + $0x98] sm:$0xff] 0.0
        %268 = vst [vmem:[#allocation2 + $0xa0] sm:$0xff] 0.0
        %269 = vst [vmem:[#allocation2 + $0xa8] sm:$0xff] 0.0
        %270 = vst [vmem:[#allocation2 + $0xb0] sm:$0xff] 0.0
        %271 = vst [vmem:[#allocation2 + $0xb8] sm:$0xff] 0.0
        %272 = vst [vmem:[#allocation2 + $0xc0] sm:$0xff] 0.0
        %273 = vst [vmem:[#allocation2 + $0xc8] sm:$0xff] 0.0
        %274 = vst [vmem:[#allocation2 + $0xd0] sm:$0xff] 0.0
        %275 = vst [vmem:[#allocation2 + $0xd8] sm:$0xff] 0.0
        %276 = vst [vmem:[#allocation2 + $0xe0] sm:$0xff] 0.0
        %277 = vst [vmem:[#allocation2 + $0xe8] sm:$0xff] 0.0
        %278 = vst [vmem:[#allocation2 + $0xf0] sm:$0xff] 0.0
        %279 = vst [vmem:[#allocation2 + $0xf8] sm:$0xff] 0.0
        %v280 = vld [vmem:[%s1] sm:$0xff]
        %v281 = vld [vmem:[%s1 + $0x8] sm:$0xff]
        %v282 = vld [vmem:[%s1 + $0x10] sm:$0xff]
        %v283 = vld [vmem:[%s1 + $0x18] sm:$0x3f]
        %v284 = vld [vmem:[%s2] sm:$0xff]
        %v285 = vld [vmem:[%s2 + $0x8] sm:$0xff]
        %v286 = vld [vmem:[%s2 + $0x10] sm:$0xff]
        %v287 = vld [vmem:[%s2 + $0x18] sm:$0x3f]
        %v288 = vld [vmem:[%s3] sm:$0xff]
        %v289 = vld [vmem:[%s3 + $0x8] sm:$0xff]
        %v290 = vld [vmem:[%s3 + $0x10] sm:$0xff]
        %v291 = vld [vmem:[%s3 + $0x18] sm:$0x3f]
        %v292 = vld [vmem:[#allocation3] sm:$0x1]
        %v293 = vld [vmem:[%s241] sm:$0xff]
        %v294 = vld [vmem:[%s241 + $0x8] sm:$0xff]
        %v295 = vld [vmem:[%s241 + $0x10] sm:$0xff]
        %v296 = vld [vmem:[%s241 + $0x18] sm:$0xff]
        %v297 = vld [vmem:[%s241 + $0x20] sm:$0xff]
        %v298 = vld [vmem:[%s241 + $0x28] sm:$0xff]
        %v299 = vld [vmem:[%s241 + $0x30] sm:$0xff]
        %v300 = vld [vmem:[%s241 + $0x38] sm:$0xff]
        %v301 = vld [vmem:[%s241 + $0x40] sm:$0xff]
        %v302 = vld [vmem:[%s241 + $0x48] sm:$0xff]
        %v303 = vld [vmem:[%s241 + $0x50] sm:$0xff]
        %v304 = vld [vmem:[%s241 + $0x58] sm:$0xff]
        %v305 = vld [vmem:[%s241 + $0x60] sm:$0xff]
        %v306 = vld [vmem:[%s241 + $0x68] sm:$0xff]
        %v307 = vld [vmem:[%s241 + $0x70] sm:$0xff]
        %v308 = vld [vmem:[%s241 + $0x78] sm:$0xff]
        %v309 = vld [vmem:[%s241 + $0x80] sm:$0xff]
        %v310 = vld [vmem:[%s241 + $0x88] sm:$0xff]
        %v311 = vld [vmem:[%s241 + $0x90] sm:$0xff]
        %v312 = vld [vmem:[%s241 + $0x98] sm:$0xff]
        %v313 = vld [vmem:[%s241 + $0xa0] sm:$0xff]
        %v314 = vld [vmem:[%s241 + $0xa8] sm:$0xff]
        %v315 = vld [vmem:[%s241 + $0xb0] sm:$0xff]
        %v316 = vld [vmem:[%s241 + $0xb8] sm:$0xff]
        %v317 = vld [vmem:[%s241 + $0xc0] sm:$0xff]
        %v318 = vld [vmem:[%s241 + $0xc8] sm:$0xff]
        %v319 = vld [vmem:[%s241 + $0xd0] sm:$0xff]
        %v320 = vld [vmem:[%s241 + $0xd8] sm:$0xff]
        %v321 = vld [vmem:[%s241 + $0xe0] sm:$0xff]
        %v322 = vld [vmem:[%s241 + $0xe8] sm:$0xff]
        %v323 = vld [vmem:[%s241 + $0xf0] sm:$0xff]
        %v324 = vld [vmem:[%s241 + $0xf8] sm:$0xff]
        %vm325 = vcmask 334848
        %326 = vst.msk [vmem:[#allocation2] sm:$0xff] %vm325, %v293
        %327 = vst.msk [vmem:[#allocation2 + $0x8] sm:$0xff] %vm325, %v294
        %328 = vst.msk [vmem:[#allocation2 + $0x10] sm:$0xff] %vm325, %v295
        %329 = vst.msk [vmem:[#allocation2 + $0x18] sm:$0xff] %vm325, %v296
        %330 = vst.msk [vmem:[#allocation2 + $0x20] sm:$0xff] %vm325, %v297
        %331 = vst.msk [vmem:[#allocation2 + $0x28] sm:$0xff] %vm325, %v298
        %332 = vst.msk [vmem:[#allocation2 + $0x30] sm:$0xff] %vm325, %v299
        %333 = vst.msk [vmem:[#allocation2 + $0x38] sm:$0xff] %vm325, %v300
        %334 = vst.msk [vmem:[#allocation2 + $0x40] sm:$0xff] %vm325, %v301
        %335 = vst.msk [vmem:[#allocation2 + $0x48] sm:$0xff] %vm325, %v302
        %336 = vst.msk [vmem:[#allocation2 + $0x50] sm:$0xff] %vm325, %v303
        %337 = vst.msk [vmem:[#allocation2 + $0x58] sm:$0xff] %vm325, %v304
        %338 = vst.msk [vmem:[#allocation2 + $0x60] sm:$0xff] %vm325, %v305
        %339 = vst.msk [vmem:[#allocation2 + $0x68] sm:$0xff] %vm325, %v306
        %340 = vst.msk [vmem:[#allocation2 + $0x70] sm:$0xff] %vm325, %v307
        %341 = vst.msk [vmem:[#allocation2 + $0x78] sm:$0xff] %vm325, %v308
        %342 = vst.msk [vmem:[#allocation2 + $0x80] sm:$0xff] %vm325, %v309
        %343 = vst.msk [vmem:[#allocation2 + $0x88] sm:$0xff] %vm325, %v310
        %344 = vst.msk [vmem:[#allocation2 + $0x90] sm:$0xff] %vm325, %v311
        %345 = vst.msk [vmem:[#allocation2 + $0x98] sm:$0xff] %vm325, %v312
        %346 = vst.msk [vmem:[#allocation2 + $0xa0] sm:$0xff] %vm325, %v313
        %347 = vst.msk [vmem:[#allocation2 + $0xa8] sm:$0xff] %vm325, %v314
        %348 = vst.msk [vmem:[#allocation2 + $0xb0] sm:$0xff] %vm325, %v315
        %349 = vst.msk [vmem:[#allocation2 + $0xb8] sm:$0xff] %vm325, %v316
        %350 = vst.msk [vmem:[#allocation2 + $0xc0] sm:$0xff] %vm325, %v317
        %351 = vst.msk [vmem:[#allocation2 + $0xc8] sm:$0xff] %vm325, %v318
        %352 = vst.msk [vmem:[#allocation2 + $0xd0] sm:$0xff] %vm325, %v319
        %353 = vst.msk [vmem:[#allocation2 + $0xd8] sm:$0xff] %vm325, %v320
        %354 = vst.msk [vmem:[#allocation2 + $0xe0] sm:$0xff] %vm325, %v321
        %355 = vst.msk [vmem:[#allocation2 + $0xe8] sm:$0xff] %vm325, %v322
        %356 = vst.msk [vmem:[#allocation2 + $0xf0] sm:$0xff] %vm325, %v323
        %357 = vst.msk [vmem:[#allocation2 + $0xf8] sm:$0xff] %vm325, %v324
        %v358 = vld [vmem:[#allocation2] sm:$0xff]
        %v359 = vld [vmem:[#allocation2 + $0x8] sm:$0xff]
        %v360 = vld [vmem:[#allocation2 + $0x10] sm:$0xff]
        %v361 = vld [vmem:[#allocation2 + $0x18] sm:$0xff]
        %v362 = vld [vmem:[#allocation2 + $0x20] sm:$0xff]
        %v363 = vld [vmem:[#allocation2 + $0x28] sm:$0xff]
        %v364 = vld [vmem:[#allocation2 + $0x30] sm:$0xff]
        %v365 = vld [vmem:[#allocation2 + $0x38] sm:$0xff]
        %v366 = vld [vmem:[#allocation2 + $0x40] sm:$0xff]
        %v367 = vld [vmem:[#allocation2 + $0x48] sm:$0xff]
        %v368 = vld [vmem:[#allocation2 + $0x50] sm:$0xff]
        %v369 = vld [vmem:[#allocation2 + $0x58] sm:$0xff]
        %v370 = vld [vmem:[#allocation2 + $0x60] sm:$0xff]
        %v371 = vld [vmem:[#allocation2 + $0x68] sm:$0xff]
        %v372 = vld [vmem:[#allocation2 + $0x70] sm:$0xff]
        %v373 = vld [vmem:[#allocation2 + $0x78] sm:$0xff]
        %v374 = vld [vmem:[#allocation2 + $0x80] sm:$0xff]
        %v375 = vld [vmem:[#allocation2 + $0x88] sm:$0xff]
        %v376 = vld [vmem:[#allocation2 + $0x90] sm:$0xff]
        %v377 = vld [vmem:[#allocation2 + $0x98] sm:$0xff]
        %v378 = vld [vmem:[#allocation2 + $0xa0] sm:$0xff]
        %v379 = vld [vmem:[#allocation2 + $0xa8] sm:$0xff]
        %v380 = vld [vmem:[#allocation2 + $0xb0] sm:$0xff]
        %v381 = vld [vmem:[#allocation2 + $0xb8] sm:$0xff]
        %v382 = vld [vmem:[#allocation2 + $0xc0] sm:$0xff]
        %v383 = vld [vmem:[#allocation2 + $0xc8] sm:$0xff]
        %v384 = vld [vmem:[#allocation2 + $0xd0] sm:$0xff]
        %v385 = vld [vmem:[#allocation2 + $0xd8] sm:$0xff]
        %v386 = vld [vmem:[#allocation2 + $0xe0] sm:$0xff]
        %v387 = vld [vmem:[#allocation2 + $0xe8] sm:$0xff]
        %v388 = vld [vmem:[#allocation2 + $0xf0] sm:$0xff]
        %v389 = vld [vmem:[#allocation2 + $0xf8] sm:$0xff]
        %391 = vset.pattern.permute.xlu0 0
        %392 = vperm.xlu0 %391, %v284
        %v393 = vpop.permute.xlu0 %392
        %396 = vset.pattern.permute.xlu0 0
        %397 = vperm.xlu0 %396, %v285
        %v398 = vpop.permute.xlu0 %397
        %401 = vset.pattern.permute.xlu0 0
        %402 = vperm.xlu0 %401, %v286
        %v403 = vpop.permute.xlu0 %402
        %406 = vset.pattern.permute.xlu0 0
        %407 = vperm.xlu0 %406, %v287
        %v408 = vpop.permute.xlu0 %407
        %410 = vmatprep.subr.mxu0 0.0
        %411 = vmatpush1.xpose.msra.mxu0 %v358
        %412 = vmatprep.subr.mxu0 0.0
        %413 = vmatpush1.xpose.msra.mxu0 %v359
        %414 = vmatprep.subr.mxu0 0.0
        %415 = vmatpush1.xpose.msra.mxu0 %v360
        %416 = vmatprep.subr.mxu0 0.0
        %417 = vmatpush1.xpose.msra.mxu0 %v361
        %418 = vmatprep.subr.mxu0 0.0
        %419 = vmatpush1.xpose.msra.mxu0 %v362
        %420 = vmatprep.subr.mxu0 0.0
        %421 = vmatpush1.xpose.msra.mxu0 %v363
        %422 = vmatprep.subr.mxu0 0.0
        %423 = vmatpush1.xpose.msra.mxu0 %v364
        %424 = vmatprep.subr.mxu0 0.0
        %425 = vmatpush1.xpose.msra.mxu0 %v365
        %426 = vmatprep.subr.mxu0 0.0
        %427 = vmatpush1.xpose.msra.mxu0 %v366
        %428 = vmatprep.subr.mxu0 0.0
        %429 = vmatpush1.xpose.msra.mxu0 %v367
        %430 = vmatprep.subr.mxu0 0.0
        %431 = vmatpush1.xpose.msra.mxu0 %v368
        %432 = vmatprep.subr.mxu0 0.0
        %433 = vmatpush1.xpose.msra.mxu0 %v369
        %434 = vmatprep.subr.mxu0 0.0
        %435 = vmatpush1.xpose.msra.mxu0 %v370
        %436 = vmatprep.subr.mxu0 0.0
        %437 = vmatpush1.xpose.msra.mxu0 %v371
        %438 = vmatprep.subr.mxu0 0.0
        %439 = vmatpush1.xpose.msra.mxu0 %v372
        %440 = vmatprep.subr.mxu0 0.0
        %441 = vmatpush1.xpose.msra.mxu0 %v373
        %442 = vmatprep.subr.mxu0 0.0
        %443 = vmatpush1.xpose.msra.mxu0 %v374
        %444 = vmatprep.subr.mxu0 0.0
        %445 = vmatpush1.xpose.msra.mxu0 %v375
        %446 = vmatprep.subr.mxu0 0.0
        %447 = vmatpush1.xpose.msra.mxu0 %v376
        %448 = vmatprep.subr.mxu0 0.0
        %449 = vmatpush1.xpose.msra.mxu0 %v377
        %450 = vmatprep.subr.mxu0 0.0
        %451 = vmatpush1.xpose.msra.mxu0 %v378
        %452 = vmatprep.subr.mxu0 0.0
        %453 = vmatpush1.xpose.msra.mxu0 %v379
        %454 = vmatprep.subr.mxu0 0.0
        %455 = vmatpush1.xpose.msra.mxu0 %v380
        %456 = vmatprep.subr.mxu0 0.0
        %457 = vmatpush1.xpose.msra.mxu0 %v381
        %458 = vmatprep.subr.mxu0 0.0
        %459 = vmatpush1.xpose.msra.mxu0 %v382
        %460 = vmatprep.subr.mxu0 0.0
        %461 = vmatpush1.xpose.msra.mxu0 %v383
        %462 = vmatprep.subr.mxu0 0.0
        %463 = vmatpush1.xpose.msra.mxu0 %v384
        %464 = vmatprep.subr.mxu0 0.0
        %465 = vmatpush1.xpose.msra.mxu0 %v385
        %466 = vmatprep.subr.mxu0 0.0
        %467 = vmatpush1.xpose.msra.mxu0 %v386
        %468 = vmatprep.subr.mxu0 0.0
        %469 = vmatpush1.xpose.msra.mxu0 %v387
        %470 = vmatprep.subr.mxu0 0.0
        %471 = vmatpush1.xpose.msra.mxu0 %v388
        %472 = vmatprep.subr.mxu0 0.0
        %473 = vmatpush1.xpose.msra.mxu0 %v389
        %474 = vmatprep.mubr.f32.mxu0 0.0
        %475 = vmatmul.mubr.f32.gmra.mrb[0].mxu0 %v280
        %v476 = vpop.f32.mrb[0].mxu0
        %v477 = vadd.f32 %v393, %v476
        %v478 = vpop.f32.mrb[0].mxu0
        %v479 = vadd.f32 %v393, %v478
        %480 = vmatprep.mubr.f32.mxu0 0.0
        %481 = vmatmul.mubr.f32.gmra.mrb[0].mxu0 %v281
        %v482 = vpop.f32.mrb[0].mxu0
        %v483 = vadd.f32 %v398, %v482
        %v484 = vpop.f32.mrb[0].mxu0
        %v485 = vadd.f32 %v398, %v484
        %486 = vmatprep.mubr.f32.mxu0 0.0
        %487 = vmatmul.mubr.f32.gmra.mrb[0].mxu0 %v282
        %v488 = vpop.f32.mrb[0].mxu0
        %v489 = vadd.f32 %v403, %v488
        %v490 = vpop.f32.mrb[0].mxu0
        %v491 = vadd.f32 %v403, %v490
        %492 = vmatprep.mubr.f32.mxu0 0.0
        %493 = vmatmul.mubr.f32.gmra.mrb[0].mxu0 %v283
        %v494 = vpop.f32.mrb[0].mxu0
        %v495 = vadd.f32 %v408, %v494
        %v496 = vpop.f32.mrb[0].mxu0
        %v497 = vadd.f32 %v408, %v496
        %498 = vdwg.mxu0
        %v499 = vmax.f32 %v477, 0.0
        %v500 = vmax.f32 %v479, 0.0
        %v501 = vmax.f32 %v483, 0.0
        %v502 = vmax.f32 %v485, 0.0
        %v503 = vmax.f32 %v489, 0.0
        %v504 = vmax.f32 %v491, 0.0
        %v505 = vmax.f32 %v495, 0.0
        %v506 = vmax.f32 %v497, 0.0
        %508 = vset.pattern.permute.xlu0 0
        %509 = vperm.xlu0 %508, %v288
        %v510 = vpop.permute.xlu0 %509
        %513 = vset.pattern.permute.xlu0 0
        %514 = vperm.xlu0 %513, %v289
        %v515 = vpop.permute.xlu0 %514
        %518 = vset.pattern.permute.xlu0 0
        %519 = vperm.xlu0 %518, %v290
        %v520 = vpop.permute.xlu0 %519
        %523 = vset.pattern.permute.xlu0 0
        %524 = vperm.xlu0 %523, %v291
        %v525 = vpop.permute.xlu0 %524
        %v527 = vmul.f32 %v499, %v510
        %v528 = vmul.f32 %v500, %v510
        %v529 = vmul.f32 %v501, %v515
        %v530 = vmul.f32 %v502, %v515
        %v531 = vmul.f32 %v503, %v520
        %v532 = vmul.f32 %v504, %v520
        %v533 = vmul.f32 %v505, %v525
        %v534 = vmul.f32 %v506, %v525
        %v535 = vadd.f32 %v527, %v529
        %v536 = vadd.f32 %v535, %v531
        %vm537 = vcmask 1045504
        %v538 = vsel %vm537, %v533, 0.0
        %v539 = vadd.f32 %v536, %v538
        %v540 = vrot.slane %v539, 4
        %v541 = vadd.f32 %v539, %v540
        %v542 = vrot.slane %v541, 2
        %v543 = vadd.f32 %v541, %v542
        %v544 = vrot.slane %v543, 1
        %v545 = vadd.f32 %v543, %v544
        %v546 = vadd.f32 %v528, %v530
        %v547 = vadd.f32 %v546, %v532
        %v548 = vsel %vm537, %v534, 0.0
        %v549 = vadd.f32 %v547, %v548
        %v550 = vrot.slane %v549, 4
        %v551 = vadd.f32 %v549, %v550
        %v552 = vrot.slane %v551, 2
        %v553 = vadd.f32 %v551, %v552
        %v554 = vrot.slane %v553, 1
        %v555 = vadd.f32 %v553, %v554
        %557 = vset.pattern.permute.xlu0 0
        %558 = vperm.xlu0 %557, %v292
        %v559 = vpop.permute.xlu0 %558
        %v561 = vlaneseq
        %v562 = vshrl.u32 %v561, 7
        %v563 = vsub.s32 0, %v562
        %v564 = vrot.slane %v559, %v563
        %v565 = vadd.f32 %v545, %v564
        %v566 = vadd.f32 %v555, %v564
        %v569 = vcombine.low %v565, %v566
        %v571 = vunpack.c.l.s4 1966171168
        %v572 = vunpack.c.0.s8 %v571
        %v573 = vlaneseq
        %v574 = vshrl.u32 %v573, 7
        %v575 = vsub.s32 %v572, %v574
        %v576 = vrot.slane %v569, %v575
        %v578 = vunpack.c.l.s4 1966171168
        %v579 = vunpack.c.0.s8 %v578
        %v580 = vlaneseq
        %v581 = vshrl.u32 %v580, 7
        %v582 = vsub.s32 %v579, %v581
        %v583 = vrot.slane %v576, %v582
        %v585 = vlaneseq
        %vm586 = vcmp.ge.s32.totalorder %v585, 0
        %vm587 = vcmp.lt.s32.totalorder %v585, 256
        %vm588 = vmand %vm586, %vm587
        %589 = vst.msk [vmem:[%s232] sm:$0x3] %vm588, %v583
        %s590 = scalar_lea.vmem %s241, 256
        %v591 = vld [vmem:[%s590] sm:$0xff]
        %v592 = vld [vmem:[%s590 + $0x8] sm:$0xff]
        %v593 = vld [vmem:[%s590 + $0x10] sm:$0xff]
        %v594 = vld [vmem:[%s590 + $0x18] sm:$0xff]
        %v595 = vld [vmem:[%s590 + $0x20] sm:$0xff]
        %v596 = vld [vmem:[%s590 + $0x28] sm:$0xff]
        %v597 = vld [vmem:[%s590 + $0x30] sm:$0xff]
        %v598 = vld [vmem:[%s590 + $0x38] sm:$0xff]
        %v599 = vld [vmem:[%s590 + $0x40] sm:$0xff]
        %v600 = vld [vmem:[%s590 + $0x48] sm:$0xff]
        %v601 = vld [vmem:[%s590 + $0x50] sm:$0xff]
        %v602 = vld [vmem:[%s590 + $0x58] sm:$0xff]
        %v603 = vld [vmem:[%s590 + $0x60] sm:$0xff]
        %v604 = vld [vmem:[%s590 + $0x68] sm:$0xff]
        %v605 = vld [vmem:[%s590 + $0x70] sm:$0xff]
        %v606 = vld [vmem:[%s590 + $0x78] sm:$0xff]
        %v607 = vld [vmem:[%s590 + $0x80] sm:$0xff]
        %v608 = vld [vmem:[%s590 + $0x88] sm:$0xff]
        %v609 = vld [vmem:[%s590 + $0x90] sm:$0xff]
        %v610 = vld [vmem:[%s590 + $0x98] sm:$0xff]
        %v611 = vld [vmem:[%s590 + $0xa0] sm:$0xff]
        %v612 = vld [vmem:[%s590 + $0xa8] sm:$0xff]
        %v613 = vld [vmem:[%s590 + $0xb0] sm:$0xff]
        %v614 = vld [vmem:[%s590 + $0xb8] sm:$0xff]
        %v615 = vld [vmem:[%s590 + $0xc0] sm:$0xff]
        %v616 = vld [vmem:[%s590 + $0xc8] sm:$0xff]
        %v617 = vld [vmem:[%s590 + $0xd0] sm:$0xff]
        %v618 = vld [vmem:[%s590 + $0xd8] sm:$0xff]
        %v619 = vld [vmem:[%s590 + $0xe0] sm:$0xff]
        %v620 = vld [vmem:[%s590 + $0xe8] sm:$0xff]
        %v621 = vld [vmem:[%s590 + $0xf0] sm:$0xff]
        %v622 = vld [vmem:[%s590 + $0xf8] sm:$0xff]
        %623 = vst.msk [vmem:[#allocation2] sm:$0xff] %vm325, %v591
        %624 = vst.msk [vmem:[#allocation2 + $0x8] sm:$0xff] %vm325, %v592
        %625 = vst.msk [vmem:[#allocation2 + $0x10] sm:$0xff] %vm325, %v593
        %626 = vst.msk [vmem:[#allocation2 + $0x18] sm:$0xff] %vm325, %v594
        %627 = vst.msk [vmem:[#allocation2 + $0x20] sm:$0xff] %vm325, %v595
        %628 = vst.msk [vmem:[#allocation2 + $0x28] sm:$0xff] %vm325, %v596
        %629 = vst.msk [vmem:[#allocation2 + $0x30] sm:$0xff] %vm325, %v597
        %630 = vst.msk [vmem:[#allocation2 + $0x38] sm:$0xff] %vm325, %v598
        %631 = vst.msk [vmem:[#allocation2 + $0x40] sm:$0xff] %vm325, %v599
        %632 = vst.msk [vmem:[#allocation2 + $0x48] sm:$0xff] %vm325, %v600
        %633 = vst.msk [vmem:[#allocation2 + $0x50] sm:$0xff] %vm325, %v601
        %634 = vst.msk [vmem:[#allocation2 + $0x58] sm:$0xff] %vm325, %v602
        %635 = vst.msk [vmem:[#allocation2 + $0x60] sm:$0xff] %vm325, %v603
        %636 = vst.msk [vmem:[#allocation2 + $0x68] sm:$0xff] %vm325, %v604
        %637 = vst.msk [vmem:[#allocation2 + $0x70] sm:$0xff] %vm325, %v605
        %638 = vst.msk [vmem:[#allocation2 + $0x78] sm:$0xff] %vm325, %v606
        %639 = vst.msk [vmem:[#allocation2 + $0x80] sm:$0xff] %vm325, %v607
        %640 = vst.msk [vmem:[#allocation2 + $0x88] sm:$0xff] %vm325, %v608
        %641 = vst.msk [vmem:[#allocation2 + $0x90] sm:$0xff] %vm325, %v609
        %642 = vst.msk [vmem:[#allocation2 + $0x98] sm:$0xff] %vm325, %v610
        %643 = vst.msk [vmem:[#allocation2 + $0xa0] sm:$0xff] %vm325, %v611
        %644 = vst.msk [vmem:[#allocation2 + $0xa8] sm:$0xff] %vm325, %v612
        %645 = vst.msk [vmem:[#allocation2 + $0xb0] sm:$0xff] %vm325, %v613
        %646 = vst.msk [vmem:[#allocation2 + $0xb8] sm:$0xff] %vm325, %v614
        %647 = vst.msk [vmem:[#allocation2 + $0xc0] sm:$0xff] %vm325, %v615
        %648 = vst.msk [vmem:[#allocation2 + $0xc8] sm:$0xff] %vm325, %v616
        %649 = vst.msk [vmem:[#allocation2 + $0xd0] sm:$0xff] %vm325, %v617
        %650 = vst.msk [vmem:[#allocation2 + $0xd8] sm:$0xff] %vm325, %v618
        %651 = vst.msk [vmem:[#allocation2 + $0xe0] sm:$0xff] %vm325, %v619
        %652 = vst.msk [vmem:[#allocation2 + $0xe8] sm:$0xff] %vm325, %v620
        %653 = vst.msk [vmem:[#allocation2 + $0xf0] sm:$0xff] %vm325, %v621
        %654 = vst.msk [vmem:[#allocation2 + $0xf8] sm:$0xff] %vm325, %v622
        %v655 = vld [vmem:[#allocation2] sm:$0xff]
        %v656 = vld [vmem:[#allocation2 + $0x8] sm:$0xff]
        %v657 = vld [vmem:[#allocation2 + $0x10] sm:$0xff]
        %v658 = vld [vmem:[#allocation2 + $0x18] sm:$0xff]
        %v659 = vld [vmem:[#allocation2 + $0x20] sm:$0xff]
        %v660 = vld [vmem:[#allocation2 + $0x28] sm:$0xff]
        %v661 = vld [vmem:[#allocation2 + $0x30] sm:$0xff]
        %v662 = vld [vmem:[#allocation2 + $0x38] sm:$0xff]
        %v663 = vld [vmem:[#allocation2 + $0x40] sm:$0xff]
        %v664 = vld [vmem:[#allocation2 + $0x48] sm:$0xff]
        %v665 = vld [vmem:[#allocation2 + $0x50] sm:$0xff]
        %v666 = vld [vmem:[#allocation2 + $0x58] sm:$0xff]
        %v667 = vld [vmem:[#allocation2 + $0x60] sm:$0xff]
        %v668 = vld [vmem:[#allocation2 + $0x68] sm:$0xff]
        %v669 = vld [vmem:[#allocation2 + $0x70] sm:$0xff]
        %v670 = vld [vmem:[#allocation2 + $0x78] sm:$0xff]
        %v671 = vld [vmem:[#allocation2 + $0x80] sm:$0xff]
        %v672 = vld [vmem:[#allocation2 + $0x88] sm:$0xff]
        %v673 = vld [vmem:[#allocation2 + $0x90] sm:$0xff]
        %v674 = vld [vmem:[#allocation2 + $0x98] sm:$0xff]
        %v675 = vld [vmem:[#allocation2 + $0xa0] sm:$0xff]
        %v676 = vld [vmem:[#allocation2 + $0xa8] sm:$0xff]
        %v677 = vld [vmem:[#allocation2 + $0xb0] sm:$0xff]
        %v678 = vld [vmem:[#allocation2 + $0xb8] sm:$0xff]
        %v679 = vld [vmem:[#allocation2 + $0xc0] sm:$0xff]
        %v680 = vld [vmem:[#allocation2 + $0xc8] sm:$0xff]
        %v681 = vld [vmem:[#allocation2 + $0xd0] sm:$0xff]
        %v682 = vld [vmem:[#allocation2 + $0xd8] sm:$0xff]
        %v683 = vld [vmem:[#allocation2 + $0xe0] sm:$0xff]
        %v684 = vld [vmem:[#allocation2 + $0xe8] sm:$0xff]
        %v685 = vld [vmem:[#allocation2 + $0xf0] sm:$0xff]
        %v686 = vld [vmem:[#allocation2 + $0xf8] sm:$0xff]
        %687 = vmatprep.subr.mxu0 0.0
        %688 = vmatpush1.xpose.msra.mxu0 %v655
        %689 = vmatprep.subr.mxu0 0.0
        %690 = vmatpush1.xpose.msra.mxu0 %v656
        %691 = vmatprep.subr.mxu0 0.0
        %692 = vmatpush1.xpose.msra.mxu0 %v657
        %693 = vmatprep.subr.mxu0 0.0
        %694 = vmatpush1.xpose.msra.mxu0 %v658
        %695 = vmatprep.subr.mxu0 0.0
        %696 = vmatpush1.xpose.msra.mxu0 %v659
        %697 = vmatprep.subr.mxu0 0.0
        %698 = vmatpush1.xpose.msra.mxu0 %v660
        %699 = vmatprep.subr.mxu0 0.0
        %700 = vmatpush1.xpose.msra.mxu0 %v661
        %701 = vmatprep.subr.mxu0 0.0
        %702 = vmatpush1.xpose.msra.mxu0 %v662
        %703 = vmatprep.subr.mxu0 0.0
        %704 = vmatpush1.xpose.msra.mxu0 %v663
        %705 = vmatprep.subr.mxu0 0.0
        %706 = vmatpush1.xpose.msra.mxu0 %v664
        %707 = vmatprep.subr.mxu0 0.0
        %708 = vmatpush1.xpose.msra.mxu0 %v665
        %709 = vmatprep.subr.mxu0 0.0
        %710 = vmatpush1.xpose.msra.mxu0 %v666
        %711 = vmatprep.subr.mxu0 0.0
        %712 = vmatpush1.xpose.msra.mxu0 %v667
        %713 = vmatprep.subr.mxu0 0.0
        %714 = vmatpush1.xpose.msra.mxu0 %v668
        %715 = vmatprep.subr.mxu0 0.0
        %716 = vmatpush1.xpose.msra.mxu0 %v669
        %717 = vmatprep.subr.mxu0 0.0
        %718 = vmatpush1.xpose.msra.mxu0 %v670
        %719 = vmatprep.subr.mxu0 0.0
        %720 = vmatpush1.xpose.msra.mxu0 %v671
        %721 = vmatprep.subr.mxu0 0.0
        %722 = vmatpush1.xpose.msra.mxu0 %v672
        %723 = vmatprep.subr.mxu0 0.0
        %724 = vmatpush1.xpose.msra.mxu0 %v673
        %725 = vmatprep.subr.mxu0 0.0
        %726 = vmatpush1.xpose.msra.mxu0 %v674
        %727 = vmatprep.subr.mxu0 0.0
        %728 = vmatpush1.xpose.msra.mxu0 %v675
        %729 = vmatprep.subr.mxu0 0.0
        %730 = vmatpush1.xpose.msra.mxu0 %v676
        %731 = vmatprep.subr.mxu0 0.0
        %732 = vmatpush1.xpose.msra.mxu0 %v677
        %733 = vmatprep.subr.mxu0 0.0
        %734 = vmatpush1.xpose.msra.mxu0 %v678
        %735 = vmatprep.subr.mxu0 0.0
        %736 = vmatpush1.xpose.msra.mxu0 %v679
        %737 = vmatprep.subr.mxu0 0.0
        %738 = vmatpush1.xpose.msra.mxu0 %v680
        %739 = vmatprep.subr.mxu0 0.0
        %740 = vmatpush1.xpose.msra.mxu0 %v681
        %741 = vmatprep.subr.mxu0 0.0
        %742 = vmatpush1.xpose.msra.mxu0 %v682
        %743 = vmatprep.subr.mxu0 0.0
        %744 = vmatpush1.xpose.msra.mxu0 %v683
        %745 = vmatprep.subr.mxu0 0.0
        %746 = vmatpush1.xpose.msra.mxu0 %v684
        %747 = vmatprep.subr.mxu0 0.0
        %748 = vmatpush1.xpose.msra.mxu0 %v685
        %749 = vmatprep.subr.mxu0 0.0
        %750 = vmatpush1.xpose.msra.mxu0 %v686
        %751 = vmatprep.mubr.f32.mxu0 0.0
        %752 = vmatmul.mubr.f32.gmra.mrb[0].mxu0 %v280
        %v753 = vpop.f32.mrb[0].mxu0
        %v754 = vadd.f32 %v393, %v753
        %v755 = vpop.f32.mrb[0].mxu0
        %v756 = vadd.f32 %v393, %v755
        %757 = vmatprep.mubr.f32.mxu0 0.0
        %758 = vmatmul.mubr.f32.gmra.mrb[0].mxu0 %v281
        %v759 = vpop.f32.mrb[0].mxu0
        %v760 = vadd.f32 %v398, %v759
        %v761 = vpop.f32.mrb[0].mxu0
        %v762 = vadd.f32 %v398, %v761
        %763 = vmatprep.mubr.f32.mxu0 0.0
        %764 = vmatmul.mubr.f32.gmra.mrb[0].mxu0 %v282
        %v765 = vpop.f32.mrb[0].mxu0
        %v766 = vadd.f32 %v403, %v765
        %v767 = vpop.f32.mrb[0].mxu0
        %v768 = vadd.f32 %v403, %v767
        %769 = vmatprep.mubr.f32.mxu0 0.0
        %770 = vmatmul.mubr.f32.gmra.mrb[0].mxu0 %v283
        %v771 = vpop.f32.mrb[0].mxu0
        %v772 = vadd.f32 %v408, %v771
        %v773 = vpop.f32.mrb[0].mxu0
        %v774 = vadd.f32 %v408, %v773
        %775 = vdwg.mxu0
        %v776 = vmax.f32 %v754, 0.0
        %v777 = vmax.f32 %v756, 0.0
        %v778 = vmax.f32 %v760, 0.0
        %v779 = vmax.f32 %v762, 0.0
        %v780 = vmax.f32 %v766, 0.0
        %v781 = vmax.f32 %v768, 0.0
        %v782 = vmax.f32 %v772, 0.0
        %v783 = vmax.f32 %v774, 0.0
        %v784 = vmul.f32 %v776, %v510
        %v785 = vmul.f32 %v777, %v510
        %v786 = vmul.f32 %v778, %v515
        %v787 = vmul.f32 %v779, %v515
        %v788 = vmul.f32 %v780, %v520
        %v789 = vmul.f32 %v781, %v520
        %v790 = vmul.f32 %v782, %v525
        %v791 = vmul.f32 %v783, %v525
        %v792 = vadd.f32 %v784, %v786
        %v793 = vadd.f32 %v792, %v788
        %v794 = vsel %vm537, %v790, 0.0
        %v795 = vadd.f32 %v793, %v794
        %v796 = vrot.slane %v795, 4
        %v797 = vadd.f32 %v795, %v796
        %v798 = vrot.slane %v797, 2
        %v799 = vadd.f32 %v797, %v798
        %v800 = vrot.slane %v799, 1
        %v801 = vadd.f32 %v799, %v800
        %v802 = vadd.f32 %v785, %v787
        %v803 = vadd.f32 %v802, %v789
        %v804 = vsel %vm537, %v791, 0.0
        %v805 = vadd.f32 %v803, %v804
        %v806 = vrot.slane %v805, 4
        %v807 = vadd.f32 %v805, %v806
        %v808 = vrot.slane %v807, 2
        %v809 = vadd.f32 %v807, %v808
        %v810 = vrot.slane %v809, 1
        %v811 = vadd.f32 %v809, %v810
        %v812 = vadd.f32 %v801, %v564
        %v813 = vadd.f32 %v811, %v564
        %v816 = vcombine.low %v812, %v813
        %v818 = vunpack.c.l.s4 1966171168
        %v819 = vunpack.c.0.s8 %v818
        %v820 = vlaneseq
        %v821 = vshrl.u32 %v820, 7
        %v822 = vsub.s32 %v819, %v821
        %v823 = vrot.slane %v816, %v822
        %v825 = vunpack.c.l.s4 1966171168
        %v826 = vunpack.c.0.s8 %v825
        %v827 = vlaneseq
        %v828 = vshrl.u32 %v827, 7
        %v829 = vsub.s32 %v826, %v828
        %v830 = vrot.slane %v823, %v829
        %s832 = scalar_lea.vmem %s232, 2 [#allocation4]
        %833 = vst.msk [vmem:[%s832] sm:$0x3] %vm588, %v830
        %s834 = scalar_lea.vmem %s241, 512
        %v835 = vld [vmem:[%s834] sm:$0xff]
        %v836 = vld [vmem:[%s834 + $0x8] sm:$0xff]
        %v837 = vld [vmem:[%s834 + $0x10] sm:$0xff]
        %v838 = vld [vmem:[%s834 + $0x18] sm:$0xff]
        %v839 = vld [vmem:[%s834 + $0x20] sm:$0xff]
        %v840 = vld [vmem:[%s834 + $0x28] sm:$0xff]
        %v841 = vld [vmem:[%s834 + $0x30] sm:$0xff]
        %v842 = vld [vmem:[%s834 + $0x38] sm:$0xff]
        %v843 = vld [vmem:[%s834 + $0x40] sm:$0xff]
        %v844 = vld [vmem:[%s834 + $0x48] sm:$0xff]
        %v845 = vld [vmem:[%s834 + $0x50] sm:$0xff]
        %v846 = vld [vmem:[%s834 + $0x58] sm:$0xff]
        %v847 = vld [vmem:[%s834 + $0x60] sm:$0xff]
        %v848 = vld [vmem:[%s834 + $0x68] sm:$0xff]
        %v849 = vld [vmem:[%s834 + $0x70] sm:$0xff]
        %v850 = vld [vmem:[%s834 + $0x78] sm:$0xff]
        %v851 = vld [vmem:[%s834 + $0x80] sm:$0xff]
        %v852 = vld [vmem:[%s834 + $0x88] sm:$0xff]
        %v853 = vld [vmem:[%s834 + $0x90] sm:$0xff]
        %v854 = vld [vmem:[%s834 + $0x98] sm:$0xff]
        %v855 = vld [vmem:[%s834 + $0xa0] sm:$0xff]
        %v856 = vld [vmem:[%s834 + $0xa8] sm:$0xff]
        %v857 = vld [vmem:[%s834 + $0xb0] sm:$0xff]
        %v858 = vld [vmem:[%s834 + $0xb8] sm:$0xff]
        %v859 = vld [vmem:[%s834 + $0xc0] sm:$0xff]
        %v860 = vld [vmem:[%s834 + $0xc8] sm:$0xff]
        %v861 = vld [vmem:[%s834 + $0xd0] sm:$0xff]
        %v862 = vld [vmem:[%s834 + $0xd8] sm:$0xff]
        %v863 = vld [vmem:[%s834 + $0xe0] sm:$0xff]
        %v864 = vld [vmem:[%s834 + $0xe8] sm:$0xff]
        %v865 = vld [vmem:[%s834 + $0xf0] sm:$0xff]
        %v866 = vld [vmem:[%s834 + $0xf8] sm:$0xff]
        %867 = vst.msk [vmem:[#allocation2] sm:$0xff] %vm325, %v835
        %868 = vst.msk [vmem:[#allocation2 + $0x8] sm:$0xff] %vm325, %v836
        %869 = vst.msk [vmem:[#allocation2 + $0x10] sm:$0xff] %vm325, %v837
        %870 = vst.msk [vmem:[#allocation2 + $0x18] sm:$0xff] %vm325, %v838
        %871 = vst.msk [vmem:[#allocation2 + $0x20] sm:$0xff] %vm325, %v839
        %872 = vst.msk [vmem:[#allocation2 + $0x28] sm:$0xff] %vm325, %v840
        %873 = vst.msk [vmem:[#allocation2 + $0x30] sm:$0xff] %vm325, %v841
        %874 = vst.msk [vmem:[#allocation2 + $0x38] sm:$0xff] %vm325, %v842
        %875 = vst.msk [vmem:[#allocation2 + $0x40] sm:$0xff] %vm325, %v843
        %876 = vst.msk [vmem:[#allocation2 + $0x48] sm:$0xff] %vm325, %v844
        %877 = vst.msk [vmem:[#allocation2 + $0x50] sm:$0xff] %vm325, %v845
        %878 = vst.msk [vmem:[#allocation2 + $0x58] sm:$0xff] %vm325, %v846
        %879 = vst.msk [vmem:[#allocation2 + $0x60] sm:$0xff] %vm325, %v847
        %880 = vst.msk [vmem:[#allocation2 + $0x68] sm:$0xff] %vm325, %v848
        %881 = vst.msk [vmem:[#allocation2 + $0x70] sm:$0xff] %vm325, %v849
        %882 = vst.msk [vmem:[#allocation2 + $0x78] sm:$0xff] %vm325, %v850
        %883 = vst.msk [vmem:[#allocation2 + $0x80] sm:$0xff] %vm325, %v851
        %884 = vst.msk [vmem:[#allocation2 + $0x88] sm:$0xff] %vm325, %v852
        %885 = vst.msk [vmem:[#allocation2 + $0x90] sm:$0xff] %vm325, %v853
        %886 = vst.msk [vmem:[#allocation2 + $0x98] sm:$0xff] %vm325, %v854
        %887 = vst.msk [vmem:[#allocation2 + $0xa0] sm:$0xff] %vm325, %v855
        %888 = vst.msk [vmem:[#allocation2 + $0xa8] sm:$0xff] %vm325, %v856
        %889 = vst.msk [vmem:[#allocation2 + $0xb0] sm:$0xff] %vm325, %v857
        %890 = vst.msk [vmem:[#allocation2 + $0xb8] sm:$0xff] %vm325, %v858
        %891 = vst.msk [vmem:[#allocation2 + $0xc0] sm:$0xff] %vm325, %v859
        %892 = vst.msk [vmem:[#allocation2 + $0xc8] sm:$0xff] %vm325, %v860
        %893 = vst.msk [vmem:[#allocation2 + $0xd0] sm:$0xff] %vm325, %v861
        %894 = vst.msk [vmem:[#allocation2 + $0xd8] sm:$0xff] %vm325, %v862
        %895 = vst.msk [vmem:[#allocation2 + $0xe0] sm:$0xff] %vm325, %v863
        %896 = vst.msk [vmem:[#allocation2 + $0xe8] sm:$0xff] %vm325, %v864
        %897 = vst.msk [vmem:[#allocation2 + $0xf0] sm:$0xff] %vm325, %v865
        %898 = vst.msk [vmem:[#allocation2 + $0xf8] sm:$0xff] %vm325, %v866
        %v899 = vld [vmem:[#allocation2] sm:$0xff]
        %v900 = vld [vmem:[#allocation2 + $0x8] sm:$0xff]
        %v901 = vld [vmem:[#allocation2 + $0x10] sm:$0xff]
        %v902 = vld [vmem:[#allocation2 + $0x18] sm:$0xff]
        %v903 = vld [vmem:[#allocation2 + $0x20] sm:$0xff]
        %v904 = vld [vmem:[#allocation2 + $0x28] sm:$0xff]
        %v905 = vld [vmem:[#allocation2 + $0x30] sm:$0xff]
        %v906 = vld [vmem:[#allocation2 + $0x38] sm:$0xff]
        %v907 = vld [vmem:[#allocation2 + $0x40] sm:$0xff]
        %v908 = vld [vmem:[#allocation2 + $0x48] sm:$0xff]
        %v909 = vld [vmem:[#allocation2 + $0x50] sm:$0xff]
        %v910 = vld [vmem:[#allocation2 + $0x58] sm:$0xff]
        %v911 = vld [vmem:[#allocation2 + $0x60] sm:$0xff]
        %v912 = vld [vmem:[#allocation2 + $0x68] sm:$0xff]
        %v913 = vld [vmem:[#allocation2 + $0x70] sm:$0xff]
        %v914 = vld [vmem:[#allocation2 + $0x78] sm:$0xff]
        %v915 = vld [vmem:[#allocation2 + $0x80] sm:$0xff]
        %v916 = vld [vmem:[#allocation2 + $0x88] sm:$0xff]
        %v917 = vld [vmem:[#allocation2 + $0x90] sm:$0xff]
        %v918 = vld [vmem:[#allocation2 + $0x98] sm:$0xff]
        %v919 = vld [vmem:[#allocation2 + $0xa0] sm:$0xff]
        %v920 = vld [vmem:[#allocation2 + $0xa8] sm:$0xff]
        %v921 = vld [vmem:[#allocation2 + $0xb0] sm:$0xff]
        %v922 = vld [vmem:[#allocation2 + $0xb8] sm:$0xff]
        %v923 = vld [vmem:[#allocation2 + $0xc0] sm:$0xff]
        %v924 = vld [vmem:[#allocation2 + $0xc8] sm:$0xff]
        %v925 = vld [vmem:[#allocation2 + $0xd0] sm:$0xff]
        %v926 = vld [vmem:[#allocation2 + $0xd8] sm:$0xff]
        %v927 = vld [vmem:[#allocation2 + $0xe0] sm:$0xff]
        %v928 = vld [vmem:[#allocation2 + $0xe8] sm:$0xff]
        %v929 = vld [vmem:[#allocation2 + $0xf0] sm:$0xff]
        %v930 = vld [vmem:[#allocation2 + $0xf8] sm:$0xff]
        %931 = vmatprep.subr.mxu0 0.0
        %932 = vmatpush1.xpose.msra.mxu0 %v899
        %933 = vmatprep.subr.mxu0 0.0
        %934 = vmatpush1.xpose.msra.mxu0 %v900
        %935 = vmatprep.subr.mxu0 0.0
        %936 = vmatpush1.xpose.msra.mxu0 %v901
        %937 = vmatprep.subr.mxu0 0.0
        %938 = vmatpush1.xpose.msra.mxu0 %v902
        %939 = vmatprep.subr.mxu0 0.0
        %940 = vmatpush1.xpose.msra.mxu0 %v903
        %941 = vmatprep.subr.mxu0 0.0
        %942 = vmatpush1.xpose.msra.mxu0 %v904
        %943 = vmatprep.subr.mxu0 0.0
        %944 = vmatpush1.xpose.msra.mxu0 %v905
        %945 = vmatprep.subr.mxu0 0.0
        %946 = vmatpush1.xpose.msra.mxu0 %v906
        %947 = vmatprep.subr.mxu0 0.0
        %948 = vmatpush1.xpose.msra.mxu0 %v907
        %949 = vmatprep.subr.mxu0 0.0
        %950 = vmatpush1.xpose.msra.mxu0 %v908
        %951 = vmatprep.subr.mxu0 0.0
        %952 = vmatpush1.xpose.msra.mxu0 %v909
        %953 = vmatprep.subr.mxu0 0.0
        %954 = vmatpush1.xpose.msra.mxu0 %v910
        %955 = vmatprep.subr.mxu0 0.0
        %956 = vmatpush1.xpose.msra.mxu0 %v911
        %957 = vmatprep.subr.mxu0 0.0
        %958 = vmatpush1.xpose.msra.mxu0 %v912
        %959 = vmatprep.subr.mxu0 0.0
        %960 = vmatpush1.xpose.msra.mxu0 %v913
        %961 = vmatprep.subr.mxu0 0.0
        %962 = vmatpush1.xpose.msra.mxu0 %v914
        %963 = vmatprep.subr.mxu0 0.0
        %964 = vmatpush1.xpose.msra.mxu0 %v915
        %965 = vmatprep.subr.mxu0 0.0
        %966 = vmatpush1.xpose.msra.mxu0 %v916
        %967 = vmatprep.subr.mxu0 0.0
        %968 = vmatpush1.xpose.msra.mxu0 %v917
        %969 = vmatprep.subr.mxu0 0.0
        %970 = vmatpush1.xpose.msra.mxu0 %v918
        %971 = vmatprep.subr.mxu0 0.0
        %972 = vmatpush1.xpose.msra.mxu0 %v919
        %973 = vmatprep.subr.mxu0 0.0
        %974 = vmatpush1.xpose.msra.mxu0 %v920
        %975 = vmatprep.subr.mxu0 0.0
        %976 = vmatpush1.xpose.msra.mxu0 %v921
        %977 = vmatprep.subr.mxu0 0.0
        %978 = vmatpush1.xpose.msra.mxu0 %v922
        %979 = vmatprep.subr.mxu0 0.0
        %980 = vmatpush1.xpose.msra.mxu0 %v923
        %981 = vmatprep.subr.mxu0 0.0
        %982 = vmatpush1.xpose.msra.mxu0 %v924
        %983 = vmatprep.subr.mxu0 0.0
        %984 = vmatpush1.xpose.msra.mxu0 %v925
        %985 = vmatprep.subr.mxu0 0.0
        %986 = vmatpush1.xpose.msra.mxu0 %v926
        %987 = vmatprep.subr.mxu0 0.0
        %988 = vmatpush1.xpose.msra.mxu0 %v927
        %989 = vmatprep.subr.mxu0 0.0
        %990 = vmatpush1.xpose.msra.mxu0 %v928
        %991 = vmatprep.subr.mxu0 0.0
        %992 = vmatpush1.xpose.msra.mxu0 %v929
        %993 = vmatprep.subr.mxu0 0.0
        %994 = vmatpush1.xpose.msra.mxu0 %v930
        %995 = vmatprep.mubr.f32.mxu0 0.0
        %996 = vmatmul.mubr.f32.gmra.mrb[0].mxu0 %v280
        %v997 = vpop.f32.mrb[0].mxu0
        %v998 = vadd.f32 %v393, %v997
        %v999 = vpop.f32.mrb[0].mxu0
        %v1000 = vadd.f32 %v393, %v999
        %1001 = vmatprep.mubr.f32.mxu0 0.0
        %1002 = vmatmul.mubr.f32.gmra.mrb[0].mxu0 %v281
        %v1003 = vpop.f32.mrb[0].mxu0
        %v1004 = vadd.f32 %v398, %v1003
        %v1005 = vpop.f32.mrb[0].mxu0
        %v1006 = vadd.f32 %v398, %v1005
        %1007 = vmatprep.mubr.f32.mxu0 0.0
        %1008 = vmatmul.mubr.f32.gmra.mrb[0].mxu0 %v282
        %v1009 = vpop.f32.mrb[0].mxu0
        %v1010 = vadd.f32 %v403, %v1009
        %v1011 = vpop.f32.mrb[0].mxu0
        %v1012 = vadd.f32 %v403, %v1011
        %1013 = vmatprep.mubr.f32.mxu0 0.0
        %1014 = vmatmul.mubr.f32.gmra.mrb[0].mxu0 %v283
        %v1015 = vpop.f32.mrb[0].mxu0
        %v1016 = vadd.f32 %v408, %v1015
        %v1017 = vpop.f32.mrb[0].mxu0
        %v1018 = vadd.f32 %v408, %v1017
        %1019 = vdwg.mxu0
        %v1020 = vmax.f32 %v998, 0.0
        %v1021 = vmax.f32 %v1000, 0.0
        %v1022 = vmax.f32 %v1004, 0.0
        %v1023 = vmax.f32 %v1006, 0.0
        %v1024 = vmax.f32 %v1010, 0.0
        %v1025 = vmax.f32 %v1012, 0.0
        %v1026 = vmax.f32 %v1016, 0.0
        %v1027 = vmax.f32 %v1018, 0.0
        %v1028 = vmul.f32 %v1020, %v510
        %v1029 = vmul.f32 %v1021, %v510
        %v1030 = vmul.f32 %v1022, %v515
        %v1031 = vmul.f32 %v1023, %v515
        %v1032 = vmul.f32 %v1024, %v520
        %v1033 = vmul.f32 %v1025, %v520
        %v1034 = vmul.f32 %v1026, %v525
        %v1035 = vmul.f32 %v1027, %v525
        %v1036 = vadd.f32 %v1028, %v1030
        %v1037 = vadd.f32 %v1036, %v1032
        %v1038 = vsel %vm537, %v1034, 0.0
        %v1039 = vadd.f32 %v1037, %v1038
        %v1040 = vrot.slane %v1039, 4
        %v1041 = vadd.f32 %v1039, %v1040
        %v1042 = vrot.slane %v1041, 2
        %v1043 = vadd.f32 %v1041, %v1042
        %v1044 = vrot.slane %v1043, 1
        %v1045 = vadd.f32 %v1043, %v1044
        %v1046 = vadd.f32 %v1029, %v1031
        %v1047 = vadd.f32 %v1046, %v1033
        %v1048 = vsel %vm537, %v1035, 0.0
        %v1049 = vadd.f32 %v1047, %v1048
        %v1050 = vrot.slane %v1049, 4
        %v1051 = vadd.f32 %v1049, %v1050
        %v1052 = vrot.slane %v1051, 2
        %v1053 = vadd.f32 %v1051, %v1052
        %v1054 = vrot.slane %v1053, 1
        %v1055 = vadd.f32 %v1053, %v1054
        %v1056 = vadd.f32 %v1045, %v564
        %v1057 = vadd.f32 %v1055, %v564
        %v1060 = vcombine.low %v1056, %v1057
        %v1062 = vunpack.c.l.s4 1966171168
        %v1063 = vunpack.c.0.s8 %v1062
        %v1064 = vlaneseq
        %v1065 = vshrl.u32 %v1064, 7
        %v1066 = vsub.s32 %v1063, %v1065
        %v1067 = vrot.slane %v1060, %v1066
        %v1069 = vunpack.c.l.s4 1966171168
        %v1070 = vunpack.c.0.s8 %v1069
        %v1071 = vlaneseq
        %v1072 = vshrl.u32 %v1071, 7
        %v1073 = vsub.s32 %v1070, %v1072
        %v1074 = vrot.slane %v1067, %v1073
        %s1076 = scalar_lea.vmem %s232, 4 [#allocation4]
        %1077 = vst.msk [vmem:[%s1076] sm:$0x3] %vm588, %v1074
        %s1078 = scalar_lea.vmem %s241, 768
        %v1079 = vld [vmem:[%s1078] sm:$0xff]
        %v1080 = vld [vmem:[%s1078 + $0x8] sm:$0xff]
        %v1081 = vld [vmem:[%s1078 + $0x10] sm:$0xff]
        %v1082 = vld [vmem:[%s1078 + $0x18] sm:$0xff]
        %v1083 = vld [vmem:[%s1078 + $0x20] sm:$0xff]
        %v1084 = vld [vmem:[%s1078 + $0x28] sm:$0xff]
        %v1085 = vld [vmem:[%s1078 + $0x30] sm:$0xff]
        %v1086 = vld [vmem:[%s1078 + $0x38] sm:$0xff]
        %v1087 = vld [vmem:[%s1078 + $0x40] sm:$0xff]
        %v1088 = vld [vmem:[%s1078 + $0x48] sm:$0xff]
        %v1089 = vld [vmem:[%s1078 + $0x50] sm:$0xff]
        %v1090 = vld [vmem:[%s1078 + $0x58] sm:$0xff]
        %v1091 = vld [vmem:[%s1078 + $0x60] sm:$0xff]
        %v1092 = vld [vmem:[%s1078 + $0x68] sm:$0xff]
        %v1093 = vld [vmem:[%s1078 + $0x70] sm:$0xff]
        %v1094 = vld [vmem:[%s1078 + $0x78] sm:$0xff]
        %v1095 = vld [vmem:[%s1078 + $0x80] sm:$0xff]
        %v1096 = vld [vmem:[%s1078 + $0x88] sm:$0xff]
        %v1097 = vld [vmem:[%s1078 + $0x90] sm:$0xff]
        %v1098 = vld [vmem:[%s1078 + $0x98] sm:$0xff]
        %v1099 = vld [vmem:[%s1078 + $0xa0] sm:$0xff]
        %v1100 = vld [vmem:[%s1078 + $0xa8] sm:$0xff]
        %v1101 = vld [vmem:[%s1078 + $0xb0] sm:$0xff]
        %v1102 = vld [vmem:[%s1078 + $0xb8] sm:$0xff]
        %v1103 = vld [vmem:[%s1078 + $0xc0] sm:$0xff]
        %v1104 = vld [vmem:[%s1078 + $0xc8] sm:$0xff]
        %v1105 = vld [vmem:[%s1078 + $0xd0] sm:$0xff]
        %v1106 = vld [vmem:[%s1078 + $0xd8] sm:$0xff]
        %v1107 = vld [vmem:[%s1078 + $0xe0] sm:$0xff]
        %v1108 = vld [vmem:[%s1078 + $0xe8] sm:$0xff]
        %v1109 = vld [vmem:[%s1078 + $0xf0] sm:$0xff]
        %v1110 = vld [vmem:[%s1078 + $0xf8] sm:$0xff]
        %1111 = vst.msk [vmem:[#allocation2] sm:$0xff] %vm325, %v1079
        %1112 = vst.msk [vmem:[#allocation2 + $0x8] sm:$0xff] %vm325, %v1080
        %1113 = vst.msk [vmem:[#allocation2 + $0x10] sm:$0xff] %vm325, %v1081
        %1114 = vst.msk [vmem:[#allocation2 + $0x18] sm:$0xff] %vm325, %v1082
        %1115 = vst.msk [vmem:[#allocation2 + $0x20] sm:$0xff] %vm325, %v1083
        %1116 = vst.msk [vmem:[#allocation2 + $0x28] sm:$0xff] %vm325, %v1084
        %1117 = vst.msk [vmem:[#allocation2 + $0x30] sm:$0xff] %vm325, %v1085
        %1118 = vst.msk [vmem:[#allocation2 + $0x38] sm:$0xff] %vm325, %v1086
        %1119 = vst.msk [vmem:[#allocation2 + $0x40] sm:$0xff] %vm325, %v1087
        %1120 = vst.msk [vmem:[#allocation2 + $0x48] sm:$0xff] %vm325, %v1088
        %1121 = vst.msk [vmem:[#allocation2 + $0x50] sm:$0xff] %vm325, %v1089
        %1122 = vst.msk [vmem:[#allocation2 + $0x58] sm:$0xff] %vm325, %v1090
        %1123 = vst.msk [vmem:[#allocation2 + $0x60] sm:$0xff] %vm325, %v1091
        %1124 = vst.msk [vmem:[#allocation2 + $0x68] sm:$0xff] %vm325, %v1092
        %1125 = vst.msk [vmem:[#allocation2 + $0x70] sm:$0xff] %vm325, %v1093
        %1126 = vst.msk [vmem:[#allocation2 + $0x78] sm:$0xff] %vm325, %v1094
        %1127 = vst.msk [vmem:[#allocation2 + $0x80] sm:$0xff] %vm325, %v1095
        %1128 = vst.msk [vmem:[#allocation2 + $0x88] sm:$0xff] %vm325, %v1096
        %1129 = vst.msk [vmem:[#allocation2 + $0x90] sm:$0xff] %vm325, %v1097
        %1130 = vst.msk [vmem:[#allocation2 + $0x98] sm:$0xff] %vm325, %v1098
        %1131 = vst.msk [vmem:[#allocation2 + $0xa0] sm:$0xff] %vm325, %v1099
        %1132 = vst.msk [vmem:[#allocation2 + $0xa8] sm:$0xff] %vm325, %v1100
        %1133 = vst.msk [vmem:[#allocation2 + $0xb0] sm:$0xff] %vm325, %v1101
        %1134 = vst.msk [vmem:[#allocation2 + $0xb8] sm:$0xff] %vm325, %v1102
        %1135 = vst.msk [vmem:[#allocation2 + $0xc0] sm:$0xff] %vm325, %v1103
        %1136 = vst.msk [vmem:[#allocation2 + $0xc8] sm:$0xff] %vm325, %v1104
        %1137 = vst.msk [vmem:[#allocation2 + $0xd0] sm:$0xff] %vm325, %v1105
        %1138 = vst.msk [vmem:[#allocation2 + $0xd8] sm:$0xff] %vm325, %v1106
        %1139 = vst.msk [vmem:[#allocation2 + $0xe0] sm:$0xff] %vm325, %v1107
        %1140 = vst.msk [vmem:[#allocation2 + $0xe8] sm:$0xff] %vm325, %v1108
        %1141 = vst.msk [vmem:[#allocation2 + $0xf0] sm:$0xff] %vm325, %v1109
        %1142 = vst.msk [vmem:[#allocation2 + $0xf8] sm:$0xff] %vm325, %v1110
        %v1143 = vld [vmem:[#allocation2] sm:$0xff]
        %v1144 = vld [vmem:[#allocation2 + $0x8] sm:$0xff]
        %v1145 = vld [vmem:[#allocation2 + $0x10] sm:$0xff]
        %v1146 = vld [vmem:[#allocation2 + $0x18] sm:$0xff]
        %v1147 = vld [vmem:[#allocation2 + $0x20] sm:$0xff]
        %v1148 = vld [vmem:[#allocation2 + $0x28] sm:$0xff]
        %v1149 = vld [vmem:[#allocation2 + $0x30] sm:$0xff]
        %v1150 = vld [vmem:[#allocation2 + $0x38] sm:$0xff]
        %v1151 = vld [vmem:[#allocation2 + $0x40] sm:$0xff]
        %v1152 = vld [vmem:[#allocation2 + $0x48] sm:$0xff]
        %v1153 = vld [vmem:[#allocation2 + $0x50] sm:$0xff]
        %v1154 = vld [vmem:[#allocation2 + $0x58] sm:$0xff]
        %v1155 = vld [vmem:[#allocation2 + $0x60] sm:$0xff]
        %v1156 = vld [vmem:[#allocation2 + $0x68] sm:$0xff]
        %v1157 = vld [vmem:[#allocation2 + $0x70] sm:$0xff]
        %v1158 = vld [vmem:[#allocation2 + $0x78] sm:$0xff]
        %v1159 = vld [vmem:[#allocation2 + $0x80] sm:$0xff]
        %v1160 = vld [vmem:[#allocation2 + $0x88] sm:$0xff]
        %v1161 = vld [vmem:[#allocation2 + $0x90] sm:$0xff]
        %v1162 = vld [vmem:[#allocation2 + $0x98] sm:$0xff]
        %v1163 = vld [vmem:[#allocation2 + $0xa0] sm:$0xff]
        %v1164 = vld [vmem:[#allocation2 + $0xa8] sm:$0xff]
        %v1165 = vld [vmem:[#allocation2 + $0xb0] sm:$0xff]
        %v1166 = vld [vmem:[#allocation2 + $0xb8] sm:$0xff]
        %v1167 = vld [vmem:[#allocation2 + $0xc0] sm:$0xff]
        %v1168 = vld [vmem:[#allocation2 + $0xc8] sm:$0xff]
        %v1169 = vld [vmem:[#allocation2 + $0xd0] sm:$0xff]
        %v1170 = vld [vmem:[#allocation2 + $0xd8] sm:$0xff]
        %v1171 = vld [vmem:[#allocation2 + $0xe0] sm:$0xff]
        %v1172 = vld [vmem:[#allocation2 + $0xe8] sm:$0xff]
        %v1173 = vld [vmem:[#allocation2 + $0xf0] sm:$0xff]
        %v1174 = vld [vmem:[#allocation2 + $0xf8] sm:$0xff]
        %1175 = vmatprep.subr.mxu0 0.0
        %1176 = vmatpush1.xpose.msra.mxu0 %v1143
        %1177 = vmatprep.subr.mxu0 0.0
        %1178 = vmatpush1.xpose.msra.mxu0 %v1144
        %1179 = vmatprep.subr.mxu0 0.0
        %1180 = vmatpush1.xpose.msra.mxu0 %v1145
        %1181 = vmatprep.subr.mxu0 0.0
        %1182 = vmatpush1.xpose.msra.mxu0 %v1146
        %1183 = vmatprep.subr.mxu0 0.0
        %1184 = vmatpush1.xpose.msra.mxu0 %v1147
        %1185 = vmatprep.subr.mxu0 0.0
        %1186 = vmatpush1.xpose.msra.mxu0 %v1148
        %1187 = vmatprep.subr.mxu0 0.0
        %1188 = vmatpush1.xpose.msra.mxu0 %v1149
        %1189 = vmatprep.subr.mxu0 0.0
        %1190 = vmatpush1.xpose.msra.mxu0 %v1150
        %1191 = vmatprep.subr.mxu0 0.0
        %1192 = vmatpush1.xpose.msra.mxu0 %v1151
        %1193 = vmatprep.subr.mxu0 0.0
        %1194 = vmatpush1.xpose.msra.mxu0 %v1152
        %1195 = vmatprep.subr.mxu0 0.0
        %1196 = vmatpush1.xpose.msra.mxu0 %v1153
        %1197 = vmatprep.subr.mxu0 0.0
        %1198 = vmatpush1.xpose.msra.mxu0 %v1154
        %1199 = vmatprep.subr.mxu0 0.0
        %1200 = vmatpush1.xpose.msra.mxu0 %v1155
        %1201 = vmatprep.subr.mxu0 0.0
        %1202 = vmatpush1.xpose.msra.mxu0 %v1156
        %1203 = vmatprep.subr.mxu0 0.0
        %1204 = vmatpush1.xpose.msra.mxu0 %v1157
        %1205 = vmatprep.subr.mxu0 0.0
        %1206 = vmatpush1.xpose.msra.mxu0 %v1158
        %1207 = vmatprep.subr.mxu0 0.0
        %1208 = vmatpush1.xpose.msra.mxu0 %v1159
        %1209 = vmatprep.subr.mxu0 0.0
        %1210 = vmatpush1.xpose.msra.mxu0 %v1160
        %1211 = vmatprep.subr.mxu0 0.0
        %1212 = vmatpush1.xpose.msra.mxu0 %v1161
        %1213 = vmatprep.subr.mxu0 0.0
        %1214 = vmatpush1.xpose.msra.mxu0 %v1162
        %1215 = vmatprep.subr.mxu0 0.0
        %1216 = vmatpush1.xpose.msra.mxu0 %v1163
        %1217 = vmatprep.subr.mxu0 0.0
        %1218 = vmatpush1.xpose.msra.mxu0 %v1164
        %1219 = vmatprep.subr.mxu0 0.0
        %1220 = vmatpush1.xpose.msra.mxu0 %v1165
        %1221 = vmatprep.subr.mxu0 0.0
        %1222 = vmatpush1.xpose.msra.mxu0 %v1166
        %1223 = vmatprep.subr.mxu0 0.0
        %1224 = vmatpush1.xpose.msra.mxu0 %v1167
        %1225 = vmatprep.subr.mxu0 0.0
        %1226 = vmatpush1.xpose.msra.mxu0 %v1168
        %1227 = vmatprep.subr.mxu0 0.0
        %1228 = vmatpush1.xpose.msra.mxu0 %v1169
        %1229 = vmatprep.subr.mxu0 0.0
        %1230 = vmatpush1.xpose.msra.mxu0 %v1170
        %1231 = vmatprep.subr.mxu0 0.0
        %1232 = vmatpush1.xpose.msra.mxu0 %v1171
        %1233 = vmatprep.subr.mxu0 0.0
        %1234 = vmatpush1.xpose.msra.mxu0 %v1172
        %1235 = vmatprep.subr.mxu0 0.0
        %1236 = vmatpush1.xpose.msra.mxu0 %v1173
        %1237 = vmatprep.subr.mxu0 0.0
        %1238 = vmatpush1.xpose.msra.mxu0 %v1174
        %1239 = vmatprep.mubr.f32.mxu0 0.0
        %1240 = vmatmul.mubr.f32.gmra.mrb[0].mxu0 %v280
        %v1241 = vpop.f32.mrb[0].mxu0
        %v1242 = vadd.f32 %v393, %v1241
        %v1243 = vpop.f32.mrb[0].mxu0
        %v1244 = vadd.f32 %v393, %v1243
        %1245 = vmatprep.mubr.f32.mxu0 0.0
        %1246 = vmatmul.mubr.f32.gmra.mrb[0].mxu0 %v281
        %v1247 = vpop.f32.mrb[0].mxu0
        %v1248 = vadd.f32 %v398, %v1247
        %v1249 = vpop.f32.mrb[0].mxu0
        %v1250 = vadd.f32 %v398, %v1249
        %1251 = vmatprep.mubr.f32.mxu0 0.0
        %1252 = vmatmul.mubr.f32.gmra.mrb[0].mxu0 %v282
        %v1253 = vpop.f32.mrb[0].mxu0
        %v1254 = vadd.f32 %v403, %v1253
        %v1255 = vpop.f32.mrb[0].mxu0
        %v1256 = vadd.f32 %v403, %v1255
        %1257 = vmatprep.mubr.f32.mxu0 0.0
        %1258 = vmatmul.mubr.f32.gmra.mrb[0].mxu0 %v283
        %v1259 = vpop.f32.mrb[0].mxu0
        %v1260 = vadd.f32 %v408, %v1259
        %v1261 = vpop.f32.mrb[0].mxu0
        %v1262 = vadd.f32 %v408, %v1261
        %1263 = vdwg.mxu0
        %v1264 = vmax.f32 %v1242, 0.0
        %v1265 = vmax.f32 %v1244, 0.0
        %v1266 = vmax.f32 %v1248, 0.0
        %v1267 = vmax.f32 %v1250, 0.0
        %v1268 = vmax.f32 %v1254, 0.0
        %v1269 = vmax.f32 %v1256, 0.0
        %v1270 = vmax.f32 %v1260, 0.0
        %v1271 = vmax.f32 %v1262, 0.0
        %v1272 = vmul.f32 %v1264, %v510
        %v1273 = vmul.f32 %v1265, %v510
        %v1274 = vmul.f32 %v1266, %v515
        %v1275 = vmul.f32 %v1267, %v515
        %v1276 = vmul.f32 %v1268, %v520
        %v1277 = vmul.f32 %v1269, %v520
        %v1278 = vmul.f32 %v1270, %v525
        %v1279 = vmul.f32 %v1271, %v525
        %v1280 = vadd.f32 %v1272, %v1274
        %v1281 = vadd.f32 %v1280, %v1276
        %v1282 = vsel %vm537, %v1278, 0.0
        %v1283 = vadd.f32 %v1281, %v1282
        %v1284 = vrot.slane %v1283, 4
        %v1285 = vadd.f32 %v1283, %v1284
        %v1286 = vrot.slane %v1285, 2
        %v1287 = vadd.f32 %v1285, %v1286
        %v1288 = vrot.slane %v1287, 1
        %v1289 = vadd.f32 %v1287, %v1288
        %v1290 = vadd.f32 %v1273, %v1275
        %v1291 = vadd.f32 %v1290, %v1277
        %v1292 = vsel %vm537, %v1279, 0.0
        %v1293 = vadd.f32 %v1291, %v1292
        %v1294 = vrot.slane %v1293, 4
        %v1295 = vadd.f32 %v1293, %v1294
        %v1296 = vrot.slane %v1295, 2
        %v1297 = vadd.f32 %v1295, %v1296
        %v1298 = vrot.slane %v1297, 1
        %v1299 = vadd.f32 %v1297, %v1298
        %v1300 = vadd.f32 %v1289, %v564
        %v1301 = vadd.f32 %v1299, %v564
        %v1304 = vcombine.low %v1300, %v1301
        %v1306 = vunpack.c.l.s4 1966171168
        %v1307 = vunpack.c.0.s8 %v1306
        %v1308 = vlaneseq
        %v1309 = vshrl.u32 %v1308, 7
        %v1310 = vsub.s32 %v1307, %v1309
        %v1311 = vrot.slane %v1304, %v1310
        %v1313 = vunpack.c.l.s4 1966171168
        %v1314 = vunpack.c.0.s8 %v1313
        %v1315 = vlaneseq
        %v1316 = vshrl.u32 %v1315, 7
        %v1317 = vsub.s32 %v1314, %v1316
        %v1318 = vrot.slane %v1311, %v1317
        %s1320 = scalar_lea.vmem %s232, 6 [#allocation4]
        %1321 = vst.msk [vmem:[%s1320] sm:$0x3] %vm588, %v1318
        %s1322 = sand.u32 %s139, 1
        %s1323 = scalar_lea.sflag [#allocation5], %s1322
        %s1324 = sand.u32 %s139, 1
        %s1325 = smul.addr %s1324, 8
        %s1326 = scalar_lea.vmem [#allocation4], %s1325
        // Predicated region
        $region41: #{two_layer_net.1} parent=39 // pred_check
          %p1327 = pneg %p149
        $region42: #{two_layer_net.1} parent=39 // pred_check_branch
          %1329 = sbr.rel (%p1327) target = $region44
        $region43: #{two_layer_net.1} parent=39 // pred_region
          %s1330 = smul.u32 8, %s21
          %s1332 = ssub.s32 128, 128
          %1333 = vsyncadd %s1323, %s1332
          %s1334 = smul.addr %s1330, 16
          %s1335 = scalar_lea.hbm %s5, %s1334
          %s1337 = sshll.u32 %s1326, 4
          %s1338 = int_to_ptr.vmem [resolvable:$true] %s1337
          %1340 = dma.vmem_to_hbm [thread:$0]  %s1338, 128, %s1335, %s1323
        $region44: #{two_layer_net.1} parent=39 // pred_fallthru
          _
      $region40: #{two_layer_net.1} parent=5 // pred_fallthru
        _
      %p1341 = scmp.le.s32.totalorder 2, %s16
      // Predicated region
      $region45: #{two_layer_net.1} parent=5 // pred_check
        %p1342 = pneg %p1341
      $region46: #{two_layer_net.1} parent=5 // pred_check_branch
        %1344 = sbr.rel (%p1342) target = $region48
      $region47: #{two_layer_net.1} parent=5 // pred_region
        %s1345 = ssub.s32 %s16, 2
        // Predicated region
        $region49: #{two_layer_net.1} parent=47 // pred_check
          %p1346 = pneg %p155
        $region50: #{two_layer_net.1} parent=47 // pred_check_branch
          %1348 = sbr.rel (%p1346) target = $region52
        $region51: #{two_layer_net.1} parent=47 // pred_region
          %s1349 = sand.u32 %s140, 1
          %s1350 = scalar_lea.sflag [#allocation5], %s1349
          %s1351 = sand.u32 %s140, 1
          %s1352 = smul.addr %s1351, 8
          %s1353 = scalar_lea.vmem [#allocation4], %s1352
          %1354 = dma.done %s1350, 128
        $region52: #{two_layer_net.1} parent=47 // pred_fallthru
          _
      $region48: #{two_layer_net.1} parent=5 // pred_fallthru
        _
    $region6: #{two_layer_net.1} parent=1 // loop_footer
      %s20 = sadd.s32 1, %s16
    $region7: #{two_layer_net.1} parent=1 // loop_footer_branch
      %15 = sbr.rel target = $region3
    $region8: #{two_layer_net.1} parent=1 // loop_exit
      _
    %1355 = vsyncpa [#allocation5], 1
    %s1356 = scalar_lea.sflag [#allocation5], 1
    %1357 = vsyncpa %s1356, 1

</llo_original>
